<compile_context>
chip_gen: v5e
topology: v5e:2x2
jax: 0.10.0
libtpu: 0.0.40
codegen_flags: <defaults>
</compile_context>

<pallas_src>
import numpy as np
import jax
import jax.numpy as jnp
from jax.experimental import pallas as pl
from jax.experimental.pallas import tpu as pltpu


# ------------------------------ fused kernel ------------------------------- #

def net_fused_kernel(xf_ref, a1_ref, b1_ref, a2_ref, b2_ref,
                     wf1_ref, bf1_ref, wf2_ref, bf2_ref, o_ref):
    """Entire Net forward for one tile of TB images; all intermediates in VMEM.

    xf_ref : (4, 6*TB, 140) bf16.  xf[r0, (u)*TB + j, kh*28 + q] =
             x[j-th image, 4u + r0 + kh, q]  (kh fused into K).
    a1_ref : (140, 256) bf16 conv1 band, K = kh*28+q, N = dx*128 + pw*10 + c.
    a2_ref : (5, 128, 256) bf16 conv2 bands, K = pw*10+c1 (pad->128),
             N = dx*128 + b*20 + c2.
    wf1_ref: (4, 128, 128) bf16 fc1 weights permuted for the NCHW flatten.
    wf2_ref: (128, 128) bf16 fc2 weights (padded).
    o_ref  : (TB, 128) f32; log-softmax logits in lanes [:10].
    """
    tb = o_ref.shape[0]
    b1row = b1_ref[...]

    # ---- conv1 + 2x2 maxpool + relu (kh fused into K, dx fused into N) ----- #
    y1 = []                                  # pooled-row parity s = 0, 1
    for s in range(2):
        pooled = None
        for dy in range(2):
            r0 = 2 * s + dy
            res = jnp.dot(xf_ref[r0], a1_ref[...],
                          preferred_element_type=jnp.float32)    # (6*TB, 256)
            cand = jnp.maximum(res[:, :128], res[:, 128:])       # col-parity max
            pooled = cand if pooled is None else jnp.maximum(pooled, cand)
        # lanes 120..127 are zero padding (zero bias there keeps them zero).
        y1.append(jnp.maximum(pooled + b1row, 0.0).astype(jnp.bfloat16))

    # ---- conv2 (+Dropout2d = identity in eval) + 2x2 maxpool + relu -------- #
    # slabs2[m]: y1 pooled rows 2t+m for t = 0..3, all images -> (4*TB, 128)
    slabs2 = [y1[m % 2][(m // 2) * tb:(m // 2 + 4) * tb, :] for m in range(6)]
    pooled2 = None
    for dy in range(2):
        acc = jnp.dot(slabs2[dy], a2_ref[0], preferred_element_type=jnp.float32)
        for kh in range(1, 5):
            acc = acc + jnp.dot(slabs2[dy + kh], a2_ref[kh],
                                preferred_element_type=jnp.float32)   # (4*TB, 256)
        cand = jnp.maximum(acc[:, :128], acc[:, 128:])
        pooled2 = cand if pooled2 is None else jnp.maximum(pooled2, cand)
    y2 = jnp.maximum(pooled2 + b2_ref[...], 0.0).astype(jnp.bfloat16)  # (4*TB, 128)

    # ---- fc1 + relu [+ dropout = identity] + fc2 + log_softmax ------------- #
    # TODO(synk): training-mode stochastic dropout (pltpu.prng_*) not implemented.
    h = jnp.dot(y2[0:tb, :], wf1_ref[0], preferred_element_type=jnp.float32)
    for a in range(1, 4):
        h = h + jnp.dot(y2[a * tb:(a + 1) * tb, :], wf1_ref[a],
                        preferred_element_type=jnp.float32)
    h = jnp.maximum(h + bf1_ref[...], 0.0).astype(jnp.bfloat16)        # (TB, 128)

    logits = jnp.dot(h, wf2_ref[...],
                     preferred_element_type=jnp.float32) + bf2_ref[...]  # (TB, 128)
    # lanes >= 10 carry bias -1e30 so max / sum-exp over 128 lanes == over 10.
    mx = jnp.max(logits, axis=-1, keepdims=True)
    sh = logits - mx
    lse = jnp.log(jnp.sum(jnp.exp(sh), axis=-1, keepdims=True))
    o_ref[...] = sh - lse


# --------------------------- host-side weight prep ------------------------- #

def prepare_params(params):
    """Toeplitz-expand the convs (kh fused into K for conv1, pool col-parity dx
    fused into a padded N=256 for both convs), permute fc1 for the NCHW
    `view(-1, 320)` flatten, pad fc layers to 128 lanes. Host-side, tiny."""
    w1, b1, w2, b2, wf1, bf1, wf2, bf2 = [np.asarray(p, np.float32) for p in params]

    # conv1 band: [kh*28 + q, dx*128 + pw*10 + c] = w1[c, 0, kh, q - (2*pw + dx)]
    a1f = np.zeros((5, 28, 2, 128), np.float32)
    for kh in range(5):
        for dx in range(2):
            for pw in range(12):
                for kw in range(5):
                    a1f[kh, 2 * pw + dx + kw, dx, pw * 10:(pw + 1) * 10] = w1[:, 0, kh, kw]
    a1f = a1f.reshape(140, 256)

    b1row = np.zeros((1, 128), np.float32)
    for pw in range(12):
        b1row[0, pw * 10:(pw + 1) * 10] = b1

    # conv2 bands: [kh, pw*10 + c1, dx*128 + b*20 + c2] = w2[c2, c1, kh, pw-(2b+dx)]
    a2f = np.zeros((5, 128, 2, 128), np.float32)
    for kh in range(5):
        for dx in range(2):
            for b in range(4):
                for kw in range(5):
                    pw = 2 * b + dx + kw
                    a2f[kh, pw * 10:(pw + 1) * 10, dx, b * 20:(b + 1) * 20] = \
                        w2[:, :, kh, kw].T
    a2f = a2f.reshape(5, 128, 256)

    b2row = np.zeros((1, 128), np.float32)
    for b in range(4):
        b2row[0, b * 20:(b + 1) * 20] = b2

    # fc1 permuted for torch's NCHW flatten f = c2*16 + a*4 + b, padded to 128.
    wf1p = np.zeros((4, 128, 128), np.float32)
    for a in range(4):
        for b in range(4):
            for c2 in range(20):
                wf1p[a, b * 20 + c2, :50] = wf1[:, c2 * 16 + a * 4 + b]
    bf1row = np.zeros((1, 128), np.float32)
    bf1row[0, :50] = bf1

    # fc2 padded; pad output-lane bias = -1e30 -> exp underflows to 0 in the
    # in-kernel log_softmax over 128 lanes.
    wf2p = np.zeros((128, 128), np.float32)
    wf2p[:50, :10] = wf2.T
    bf2row = np.full((1, 128), -1e30, np.float32)
    bf2row[0, :10] = bf2

    bf16 = jnp.bfloat16
    return (jnp.asarray(a1f, bf16), jnp.asarray(b1row),
            jnp.asarray(a2f, bf16), jnp.asarray(b2row),
            jnp.asarray(wf1p, bf16), jnp.asarray(bf1row),
            jnp.asarray(wf2p, bf16), jnp.asarray(bf2row))


# ------------------------------ JAX wrapper -------------------------------- #

def _round_up(v, m):
    return (v + m - 1) // m * m


def _device_caps():
    """(batch-tile cap, vmem_limit_bytes) per TPU generation."""
    try:
        kind = jax.devices()[0].device_kind.lower()
    except Exception:
        kind = ""
    if "v7" in kind or "7x" in kind:
        # v7x: 64 MiB VMEM / TensorCore -> smaller tiles, modest scoped limit.
        return 256, 48 * 1024 * 1024
    if "v5" in kind or "v6" in kind:
        # v5e/v6e: 128 MiB VMEM, single TensorCore -> bigger batch tiles.
        return 512, 96 * 1024 * 1024
    return 256, 48 * 1024 * 1024


def net_forward(x, prepared, *, tile_n=None):
    """Forward pass of Net (eval mode). x: (N, 1, 28, 28) float32 -> (N, 10)."""
    a1f, b1row, a2f, b2row, wf1p, bf1row, wf2p, bf2row = prepared
    n = x.shape[0]
    assert x.shape[1:] == (1, 28, 28)

    cap, vmem_limit = _device_caps()
    if tile_n is None:
        tile_n = min(cap, _round_up(n, 16))
    tile_n = max(16, _round_up(tile_n, 16))   # multiple of 16 -> bf16 sublane aligned
    n_pad = _round_up(max(n, tile_n), tile_n)
    nb = n_pad // tile_n

    x2 = x.reshape(n, 28, 28)
    if n_pad != n:
        x2 = jnp.concatenate([x2, jnp.zeros((n_pad - n, 28, 28), x2.dtype)], axis=0)

    # Row-fused input layout (kh fused into lanes, row phase r0 = 0..3 split):
    #   xf[r0, (i*6 + u)*T + j, kh*28 + q] = x[i*T + j, 4u + r0 + kh, q]
    # Small XLA gather/transpose before the kernel; negligible for big batches.
    rows = (np.arange(4)[:, None, None] + 4 * np.arange(6)[None, :, None]
            + np.arange(5)[None, None, :])                    # (4, 6, 5), 0..27
    x3 = x2.reshape(nb, tile_n, 28, 28)
    g = x3[:, :, rows, :]                                     # (nb, T, 4, 6, 5, 28)
    xf = g.transpose(2, 0, 3, 1, 4, 5).reshape(4, nb * 6 * tile_n, 140)
    xf = xf.astype(jnp.bfloat16)

    out = pl.pallas_call(
        net_fused_kernel,
        out_shape=jax.ShapeDtypeStruct((n_pad, 128), jnp.float32),
        grid=(nb,),
        in_specs=[
            pl.BlockSpec((4, 6 * tile_n, 140), lambda i: (0, i, 0)),
            pl.BlockSpec((140, 256), lambda i: (0, 0)),
            pl.BlockSpec((1, 128), lambda i: (0, 0)),
            pl.BlockSpec((5, 128, 256), lambda i: (0, 0, 0)),
            pl.BlockSpec((1, 128), lambda i: (0, 0)),
            pl.BlockSpec((4, 128, 128), lambda i: (0, 0, 0)),
            pl.BlockSpec((1, 128), lambda i: (0, 0)),
            pl.BlockSpec((128, 128), lambda i: (0, 0)),
            pl.BlockSpec((1, 128), lambda i: (0, 0)),
        ],
        out_specs=pl.BlockSpec((tile_n, 128), lambda i: (i, 0)),
        compiler_params=pltpu.CompilerParams(
            dimension_semantics=("parallel",),
            vmem_limit_bytes=vmem_limit),
    )(xf, a1f, b1row, a2f, b2row, wf1p, bf1row, wf2p, bf2row)

    return out[:n, :10]


# ----------------------------- params / reference -------------------------- #

def init_params(key):
    ks = jax.random.split(key, 8)

    def u(k, shape, fan_in):
        bound = 1.0 / jnp.sqrt(jnp.float32(fan_in))
        return jax.random.uniform(k, shape, jnp.float32, -bound, bound)

    w1 = u(ks[0], (10, 1, 5, 5), 25)
    b1 = u(ks[1], (10,), 25)
    w2 = u(ks[2], (20, 10, 5, 5), 250)
    b2 = u(ks[3], (20,), 250)
    wf1 = u(ks[4], (50, 320), 320)
    bf1 = u(ks[5], (50,), 320)
    wf2 = u(ks[6], (10, 50), 50)
    bf2 = u(ks[7], (10,), 50)
    return (w1, b1, w2, b2, wf1, bf1, wf2, bf2)


def reference_forward(x, params):
    """Pure-JAX reference matching the PyTorch forward (eval mode), f32."""
    w1, b1, w2, b2, wf1, bf1, wf2, bf2 = params
    dn = ("NCHW", "OIHW", "NCHW")
    hp = jax.lax.Precision.HIGHEST
    y = jax.lax.conv_general_dilated(x, w1, (1, 1), "VALID",
                                     dimension_numbers=dn, precision=hp)
    y = y + b1[None, :, None, None]
    y = jax.lax.reduce_window(y, -jnp.inf, jax.lax.max, (1, 1, 2, 2), (1, 1, 2, 2), "VALID")
    y = jnp.maximum(y, 0.0)
    y = jax.lax.conv_general_dilated(y, w2, (1, 1), "VALID",
                                     dimension_numbers=dn, precision=hp)
    y = y + b2[None, :, None, None]
    y = jax.lax.reduce_window(y, -jnp.inf, jax.lax.max, (1, 1, 2, 2), (1, 1, 2, 2), "VALID")
    y = jnp.maximum(y, 0.0)
    y = y.reshape(y.shape[0], -1)
    y = jnp.maximum(jnp.dot(y, wf1.T, precision=hp) + bf1, 0.0)
    y = jnp.dot(y, wf2.T, precision=hp) + bf2
    return jax.nn.log_softmax(y, axis=1)


if __name__ == "__main__":
    key = jax.random.PRNGKey(0)
    k_x, k_p = jax.random.split(key)
    # 28x28 single-channel input is implied by the 320-dim flatten (20*4*4).
    x = jax.random.normal(k_x, (16, 1, 28, 28), jnp.float32)
    params = init_params(k_p)
    prepared = prepare_params(params)      # host-side, outside jit

    fwd = jax.jit(net_forward)
    out = jax.block_until_ready(fwd(x, prepared))

    ref = reference_forward(x, params)
    assert out.shape == (16, 10)
    err = float(jnp.max(jnp.abs(out - ref)))
    # bf16 matmul operands (f32 accumulation) -> slightly looser tolerance.
    assert err < 5e-2, f"mismatch vs JAX reference: max abs err {err}"
    print("KERNEL_OK")
</pallas_src>

<mosaic_0001>
module attributes {stable_mosaic.version = 11 : i64} {
  func.func @net_fused_kernel(%arg0: i32, %arg1: memref<4x96x140xbf16, #tpu.memory_space<vmem>>, %arg2: memref<140x256xbf16, #tpu.memory_space<vmem>>, %arg3: memref<1x128xf32, #tpu.memory_space<vmem>>, %arg4: memref<5x128x256xbf16, #tpu.memory_space<vmem>>, %arg5: memref<1x128xf32, #tpu.memory_space<vmem>>, %arg6: memref<4x128x128xbf16, #tpu.memory_space<vmem>>, %arg7: memref<1x128xf32, #tpu.memory_space<vmem>>, %arg8: memref<128x128xbf16, #tpu.memory_space<vmem>>, %arg9: memref<1x128xf32, #tpu.memory_space<vmem>>, %arg10: memref<16x128xf32, #tpu.memory_space<vmem>>) attributes {dimension_semantics = [#tpu.dimension_semantics<parallel>], iteration_bounds = array<i64: 1>, scalar_prefetch = 0 : i64, scratch_operands = 0 : i64, tpu.core_type = #tpu.core_type<tc>, window_params = [{transform_indices = @transform_0, window_bounds = array<i64: 4, 96, 140>}, {pipeline_mode = #tpu.pipeline_mode<synchronous>, transform_indices = @transform_1, window_bounds = array<i64: 140, 256>}, {pipeline_mode = #tpu.pipeline_mode<synchronous>, transform_indices = @transform_2, window_bounds = array<i64: 1, 128>}, {pipeline_mode = #tpu.pipeline_mode<synchronous>, transform_indices = @transform_3, window_bounds = array<i64: 5, 128, 256>}, {pipeline_mode = #tpu.pipeline_mode<synchronous>, transform_indices = @transform_4, window_bounds = array<i64: 1, 128>}, {pipeline_mode = #tpu.pipeline_mode<synchronous>, transform_indices = @transform_5, window_bounds = array<i64: 4, 128, 128>}, {pipeline_mode = #tpu.pipeline_mode<synchronous>, transform_indices = @transform_6, window_bounds = array<i64: 1, 128>}, {pipeline_mode = #tpu.pipeline_mode<synchronous>, transform_indices = @transform_7, window_bounds = array<i64: 128, 128>}, {pipeline_mode = #tpu.pipeline_mode<synchronous>, transform_indices = @transform_8, window_bounds = array<i64: 1, 128>}, {transform_indices = @transform_9, window_bounds = array<i64: 16, 128>}]} {
    %c0 = arith.constant 0 : index
    %c0_0 = arith.constant 0 : index
    %0 = vector.load %arg3[%c0, %c0_0] : memref<1x128xf32, #tpu.memory_space<vmem>>, vector<1x128xf32>
    %c0_1 = arith.constant 0 : index
    %c0_2 = arith.constant 0 : index
    %c0_3 = arith.constant 0 : index
    %1 = vector.load %arg1[%c0_1, %c0_2, %c0_3] : memref<4x96x140xbf16, #tpu.memory_space<vmem>>, vector<1x96x140xbf16>
    %2 = vector.shape_cast %1 : vector<1x96x140xbf16> to vector<96x140xbf16>
    %c0_4 = arith.constant 0 : index
    %c0_5 = arith.constant 0 : index
    %3 = vector.load %arg2[%c0_4, %c0_5] : memref<140x256xbf16, #tpu.memory_space<vmem>>, vector<140x256xbf16>
    %cst = arith.constant dense<0.000000e+00> : vector<96x256xf32>
    %4 = tpu.matmul %2, %3, %cst {dimension_numbers = #tpu.dot_dimension_numbers<[1], [0], [0], [1], [0, 0, 1, 1], [], []>} : vector<96x140xbf16>, vector<140x256xbf16>, vector<96x256xf32> -> vector<96x256xf32>
    %5 = vector.extract_strided_slice %4 {offsets = [0, 0], sizes = [96, 128], strides = [1, 1]} : vector<96x256xf32> to vector<96x128xf32>
    %6 = vector.extract_strided_slice %4 {offsets = [0, 128], sizes = [96, 128], strides = [1, 1]} : vector<96x256xf32> to vector<96x128xf32>
    %7 = arith.maximumf %5, %6 : vector<96x128xf32>
    %c1 = arith.constant 1 : index
    %c0_6 = arith.constant 0 : index
    %c0_7 = arith.constant 0 : index
    %8 = vector.load %arg1[%c1, %c0_6, %c0_7] : memref<4x96x140xbf16, #tpu.memory_space<vmem>>, vector<1x96x140xbf16>
    %9 = vector.shape_cast %8 : vector<1x96x140xbf16> to vector<96x140xbf16>
    %c0_8 = arith.constant 0 : index
    %c0_9 = arith.constant 0 : index
    %10 = vector.load %arg2[%c0_8, %c0_9] : memref<140x256xbf16, #tpu.memory_space<vmem>>, vector<140x256xbf16>
    %cst_10 = arith.constant dense<0.000000e+00> : vector<96x256xf32>
    %11 = tpu.matmul %9, %10, %cst_10 {dimension_numbers = #tpu.dot_dimension_numbers<[1], [0], [0], [1], [0, 0, 1, 1], [], []>} : vector<96x140xbf16>, vector<140x256xbf16>, vector<96x256xf32> -> vector<96x256xf32>
    %12 = vector.extract_strided_slice %11 {offsets = [0, 0], sizes = [96, 128], strides = [1, 1]} : vector<96x256xf32> to vector<96x128xf32>
    %13 = vector.extract_strided_slice %11 {offsets = [0, 128], sizes = [96, 128], strides = [1, 1]} : vector<96x256xf32> to vector<96x128xf32>
    %14 = arith.maximumf %12, %13 : vector<96x128xf32>
    %15 = arith.maximumf %7, %14 : vector<96x128xf32>
    %16 = vector.broadcast %0 : vector<1x128xf32> to vector<96x128xf32>
    %17 = arith.addf %15, %16 : vector<96x128xf32>
    %cst_11 = arith.constant 0.000000e+00 : f32
    %18 = vector.broadcast %cst_11 : f32 to vector<96x128xf32>
    %19 = arith.maximumf %17, %18 : vector<96x128xf32>
    %20 = arith.truncf %19 : vector<96x128xf32> to vector<96x128xbf16>
    %c2 = arith.constant 2 : index
    %c0_12 = arith.constant 0 : index
    %c0_13 = arith.constant 0 : index
    %21 = vector.load %arg1[%c2, %c0_12, %c0_13] : memref<4x96x140xbf16, #tpu.memory_space<vmem>>, vector<1x96x140xbf16>
    %22 = vector.shape_cast %21 : vector<1x96x140xbf16> to vector<96x140xbf16>
    %c0_14 = arith.constant 0 : index
    %c0_15 = arith.constant 0 : index
    %23 = vector.load %arg2[%c0_14, %c0_15] : memref<140x256xbf16, #tpu.memory_space<vmem>>, vector<140x256xbf16>
    %cst_16 = arith.constant dense<0.000000e+00> : vector<96x256xf32>
    %24 = tpu.matmul %22, %23, %cst_16 {dimension_numbers = #tpu.dot_dimension_numbers<[1], [0], [0], [1], [0, 0, 1, 1], [], []>} : vector<96x140xbf16>, vector<140x256xbf16>, vector<96x256xf32> -> vector<96x256xf32>
    %25 = vector.extract_strided_slice %24 {offsets = [0, 0], sizes = [96, 128], strides = [1, 1]} : vector<96x256xf32> to vector<96x128xf32>
    %26 = vector.extract_strided_slice %24 {offsets = [0, 128], sizes = [96, 128], strides = [1, 1]} : vector<96x256xf32> to vector<96x128xf32>
    %27 = arith.maximumf %25, %26 : vector<96x128xf32>
    %c3 = arith.constant 3 : index
    %c0_17 = arith.constant 0 : index
    %c0_18 = arith.constant 0 : index
    %28 = vector.load %arg1[%c3, %c0_17, %c0_18] : memref<4x96x140xbf16, #tpu.memory_space<vmem>>, vector<1x96x140xbf16>
    %29 = vector.shape_cast %28 : vector<1x96x140xbf16> to vector<96x140xbf16>
    %c0_19 = arith.constant 0 : index
    %c0_20 = arith.constant 0 : index
    %30 = vector.load %arg2[%c0_19, %c0_20] : memref<140x256xbf16, #tpu.memory_space<vmem>>, vector<140x256xbf16>
    %cst_21 = arith.constant dense<0.000000e+00> : vector<96x256xf32>
    %31 = tpu.matmul %29, %30, %cst_21 {dimension_numbers = #tpu.dot_dimension_numbers<[1], [0], [0], [1], [0, 0, 1, 1], [], []>} : vector<96x140xbf16>, vector<140x256xbf16>, vector<96x256xf32> -> vector<96x256xf32>
    %32 = vector.extract_strided_slice %31 {offsets = [0, 0], sizes = [96, 128], strides = [1, 1]} : vector<96x256xf32> to vector<96x128xf32>
    %33 = vector.extract_strided_slice %31 {offsets = [0, 128], sizes = [96, 128], strides = [1, 1]} : vector<96x256xf32> to vector<96x128xf32>
    %34 = arith.maximumf %32, %33 : vector<96x128xf32>
    %35 = arith.maximumf %27, %34 : vector<96x128xf32>
    %36 = vector.broadcast %0 : vector<1x128xf32> to vector<96x128xf32>
    %37 = arith.addf %35, %36 : vector<96x128xf32>
    %cst_22 = arith.constant 0.000000e+00 : f32
    %38 = vector.broadcast %cst_22 : f32 to vector<96x128xf32>
    %39 = arith.maximumf %37, %38 : vector<96x128xf32>
    %40 = arith.truncf %39 : vector<96x128xf32> to vector<96x128xbf16>
    %41 = vector.extract_strided_slice %20 {offsets = [0, 0], sizes = [64, 128], strides = [1, 1]} : vector<96x128xbf16> to vector<64x128xbf16>
    %42 = vector.extract_strided_slice %40 {offsets = [0, 0], sizes = [64, 128], strides = [1, 1]} : vector<96x128xbf16> to vector<64x128xbf16>
    %43 = vector.extract_strided_slice %20 {offsets = [16, 0], sizes = [64, 128], strides = [1, 1]} : vector<96x128xbf16> to vector<64x128xbf16>
    %44 = vector.extract_strided_slice %40 {offsets = [16, 0], sizes = [64, 128], strides = [1, 1]} : vector<96x128xbf16> to vector<64x128xbf16>
    %45 = vector.extract_strided_slice %20 {offsets = [32, 0], sizes = [64, 128], strides = [1, 1]} : vector<96x128xbf16> to vector<64x128xbf16>
    %46 = vector.extract_strided_slice %40 {offsets = [32, 0], sizes = [64, 128], strides = [1, 1]} : vector<96x128xbf16> to vector<64x128xbf16>
    %c0_23 = arith.constant 0 : index
    %c0_24 = arith.constant 0 : index
    %c0_25 = arith.constant 0 : index
    %47 = vector.load %arg4[%c0_23, %c0_24, %c0_25] : memref<5x128x256xbf16, #tpu.memory_space<vmem>>, vector<1x128x256xbf16>
    %48 = vector.shape_cast %47 : vector<1x128x256xbf16> to vector<128x256xbf16>
    %cst_26 = arith.constant dense<0.000000e+00> : vector<64x256xf32>
    %49 = tpu.matmul %41, %48, %cst_26 {dimension_numbers = #tpu.dot_dimension_numbers<[1], [0], [0], [1], [0, 0, 1, 1], [], []>} : vector<64x128xbf16>, vector<128x256xbf16>, vector<64x256xf32> -> vector<64x256xf32>
    %c1_27 = arith.constant 1 : index
    %c0_28 = arith.constant 0 : index
    %c0_29 = arith.constant 0 : index
    %50 = vector.load %arg4[%c1_27, %c0_28, %c0_29] : memref<5x128x256xbf16, #tpu.memory_space<vmem>>, vector<1x128x256xbf16>
    %51 = vector.shape_cast %50 : vector<1x128x256xbf16> to vector<128x256xbf16>
    %cst_30 = arith.constant dense<0.000000e+00> : vector<64x256xf32>
    %52 = tpu.matmul %42, %51, %cst_30 {dimension_numbers = #tpu.dot_dimension_numbers<[1], [0], [0], [1], [0, 0, 1, 1], [], []>} : vector<64x128xbf16>, vector<128x256xbf16>, vector<64x256xf32> -> vector<64x256xf32>
    %53 = arith.addf %49, %52 : vector<64x256xf32>
    %c2_31 = arith.constant 2 : index
    %c0_32 = arith.constant 0 : index
    %c0_33 = arith.constant 0 : index
    %54 = vector.load %arg4[%c2_31, %c0_32, %c0_33] : memref<5x128x256xbf16, #tpu.memory_space<vmem>>, vector<1x128x256xbf16>
    %55 = vector.shape_cast %54 : vector<1x128x256xbf16> to vector<128x256xbf16>
    %cst_34 = arith.constant dense<0.000000e+00> : vector<64x256xf32>
    %56 = tpu.matmul %43, %55, %cst_34 {dimension_numbers = #tpu.dot_dimension_numbers<[1], [0], [0], [1], [0, 0, 1, 1], [], []>} : vector<64x128xbf16>, vector<128x256xbf16>, vector<64x256xf32> -> vector<64x256xf32>
    %57 = arith.addf %53, %56 : vector<64x256xf32>
    %c3_35 = arith.constant 3 : index
    %c0_36 = arith.constant 0 : index
    %c0_37 = arith.constant 0 : index
    %58 = vector.load %arg4[%c3_35, %c0_36, %c0_37] : memref<5x128x256xbf16, #tpu.memory_space<vmem>>, vector<1x128x256xbf16>
    %59 = vector.shape_cast %58 : vector<1x128x256xbf16> to vector<128x256xbf16>
    %cst_38 = arith.constant dense<0.000000e+00> : vector<64x256xf32>
    %60 = tpu.matmul %44, %59, %cst_38 {dimension_numbers = #tpu.dot_dimension_numbers<[1], [0], [0], [1], [0, 0, 1, 1], [], []>} : vector<64x128xbf16>, vector<128x256xbf16>, vector<64x256xf32> -> vector<64x256xf32>
    %61 = arith.addf %57, %60 : vector<64x256xf32>
    %c4 = arith.constant 4 : index
    %c0_39 = arith.constant 0 : index
    %c0_40 = arith.constant 0 : index
    %62 = vector.load %arg4[%c4, %c0_39, %c0_40] : memref<5x128x256xbf16, #tpu.memory_space<vmem>>, vector<1x128x256xbf16>
    %63 = vector.shape_cast %62 : vector<1x128x256xbf16> to vector<128x256xbf16>
    %cst_41 = arith.constant dense<0.000000e+00> : vector<64x256xf32>
    %64 = tpu.matmul %45, %63, %cst_41 {dimension_numbers = #tpu.dot_dimension_numbers<[1], [0], [0], [1], [0, 0, 1, 1], [], []>} : vector<64x128xbf16>, vector<128x256xbf16>, vector<64x256xf32> -> vector<64x256xf32>
    %65 = arith.addf %61, %64 : vector<64x256xf32>
    %66 = vector.extract_strided_slice %65 {offsets = [0, 0], sizes = [64, 128], strides = [1, 1]} : vector<64x256xf32> to vector<64x128xf32>
    %67 = vector.extract_strided_slice %65 {offsets = [0, 128], sizes = [64, 128], strides = [1, 1]} : vector<64x256xf32> to vector<64x128xf32>
    %68 = arith.maximumf %66, %67 : vector<64x128xf32>
    %c0_42 = arith.constant 0 : index
    %c0_43 = arith.constant 0 : index
    %c0_44 = arith.constant 0 : index
    %69 = vector.load %arg4[%c0_42, %c0_43, %c0_44] : memref<5x128x256xbf16, #tpu.memory_space<vmem>>, vector<1x128x256xbf16>
    %70 = vector.shape_cast %69 : vector<1x128x256xbf16> to vector<128x256xbf16>
    %cst_45 = arith.constant dense<0.000000e+00> : vector<64x256xf32>
    %71 = tpu.matmul %42, %70, %cst_45 {dimension_numbers = #tpu.dot_dimension_numbers<[1], [0], [0], [1], [0, 0, 1, 1], [], []>} : vector<64x128xbf16>, vector<128x256xbf16>, vector<64x256xf32> -> vector<64x256xf32>
    %c1_46 = arith.constant 1 : index
    %c0_47 = arith.constant 0 : index
    %c0_48 = arith.constant 0 : index
    %72 = vector.load %arg4[%c1_46, %c0_47, %c0_48] : memref<5x128x256xbf16, #tpu.memory_space<vmem>>, vector<1x128x256xbf16>
    %73 = vector.shape_cast %72 : vector<1x128x256xbf16> to vector<128x256xbf16>
    %cst_49 = arith.constant dense<0.000000e+00> : vector<64x256xf32>
    %74 = tpu.matmul %43, %73, %cst_49 {dimension_numbers = #tpu.dot_dimension_numbers<[1], [0], [0], [1], [0, 0, 1, 1], [], []>} : vector<64x128xbf16>, vector<128x256xbf16>, vector<64x256xf32> -> vector<64x256xf32>
    %75 = arith.addf %71, %74 : vector<64x256xf32>
    %c2_50 = arith.constant 2 : index
    %c0_51 = arith.constant 0 : index
    %c0_52 = arith.constant 0 : index
    %76 = vector.load %arg4[%c2_50, %c0_51, %c0_52] : memref<5x128x256xbf16, #tpu.memory_space<vmem>>, vector<1x128x256xbf16>
    %77 = vector.shape_cast %76 : vector<1x128x256xbf16> to vector<128x256xbf16>
    %cst_53 = arith.constant dense<0.000000e+00> : vector<64x256xf32>
    %78 = tpu.matmul %44, %77, %cst_53 {dimension_numbers = #tpu.dot_dimension_numbers<[1], [0], [0], [1], [0, 0, 1, 1], [], []>} : vector<64x128xbf16>, vector<128x256xbf16>, vector<64x256xf32> -> vector<64x256xf32>
    %79 = arith.addf %75, %78 : vector<64x256xf32>
    %c3_54 = arith.constant 3 : index
    %c0_55 = arith.constant 0 : index
    %c0_56 = arith.constant 0 : index
    %80 = vector.load %arg4[%c3_54, %c0_55, %c0_56] : memref<5x128x256xbf16, #tpu.memory_space<vmem>>, vector<1x128x256xbf16>
    %81 = vector.shape_cast %80 : vector<1x128x256xbf16> to vector<128x256xbf16>
    %cst_57 = arith.constant dense<0.000000e+00> : vector<64x256xf32>
    %82 = tpu.matmul %45, %81, %cst_57 {dimension_numbers = #tpu.dot_dimension_numbers<[1], [0], [0], [1], [0, 0, 1, 1], [], []>} : vector<64x128xbf16>, vector<128x256xbf16>, vector<64x256xf32> -> vector<64x256xf32>
    %83 = arith.addf %79, %82 : vector<64x256xf32>
    %c4_58 = arith.constant 4 : index
    %c0_59 = arith.constant 0 : index
    %c0_60 = arith.constant 0 : index
    %84 = vector.load %arg4[%c4_58, %c0_59, %c0_60] : memref<5x128x256xbf16, #tpu.memory_space<vmem>>, vector<1x128x256xbf16>
    %85 = vector.shape_cast %84 : vector<1x128x256xbf16> to vector<128x256xbf16>
    %cst_61 = arith.constant dense<0.000000e+00> : vector<64x256xf32>
    %86 = tpu.matmul %46, %85, %cst_61 {dimension_numbers = #tpu.dot_dimension_numbers<[1], [0], [0], [1], [0, 0, 1, 1], [], []>} : vector<64x128xbf16>, vector<128x256xbf16>, vector<64x256xf32> -> vector<64x256xf32>
    %87 = arith.addf %83, %86 : vector<64x256xf32>
    %88 = vector.extract_strided_slice %87 {offsets = [0, 0], sizes = [64, 128], strides = [1, 1]} : vector<64x256xf32> to vector<64x128xf32>
    %89 = vector.extract_strided_slice %87 {offsets = [0, 128], sizes = [64, 128], strides = [1, 1]} : vector<64x256xf32> to vector<64x128xf32>
    %90 = arith.maximumf %88, %89 : vector<64x128xf32>
    %91 = arith.maximumf %68, %90 : vector<64x128xf32>
    %c0_62 = arith.constant 0 : index
    %c0_63 = arith.constant 0 : index
    %92 = vector.load %arg5[%c0_62, %c0_63] : memref<1x128xf32, #tpu.memory_space<vmem>>, vector<1x128xf32>
    %93 = vector.broadcast %92 : vector<1x128xf32> to vector<64x128xf32>
    %94 = arith.addf %91, %93 : vector<64x128xf32>
    %cst_64 = arith.constant 0.000000e+00 : f32
    %95 = vector.broadcast %cst_64 : f32 to vector<64x128xf32>
    %96 = arith.maximumf %94, %95 : vector<64x128xf32>
    %97 = arith.truncf %96 : vector<64x128xf32> to vector<64x128xbf16>
    %98 = vector.extract_strided_slice %97 {offsets = [0, 0], sizes = [16, 128], strides = [1, 1]} : vector<64x128xbf16> to vector<16x128xbf16>
    %c0_65 = arith.constant 0 : index
    %c0_66 = arith.constant 0 : index
    %c0_67 = arith.constant 0 : index
    %99 = vector.load %arg6[%c0_65, %c0_66, %c0_67] : memref<4x128x128xbf16, #tpu.memory_space<vmem>>, vector<1x128x128xbf16>
    %100 = vector.shape_cast %99 : vector<1x128x128xbf16> to vector<128x128xbf16>
    %cst_68 = arith.constant dense<0.000000e+00> : vector<16x128xf32>
    %101 = tpu.matmul %98, %100, %cst_68 {dimension_numbers = #tpu.dot_dimension_numbers<[1], [0], [0], [1], [0, 0, 1, 1], [], []>} : vector<16x128xbf16>, vector<128x128xbf16>, vector<16x128xf32> -> vector<16x128xf32>
    %102 = vector.extract_strided_slice %97 {offsets = [16, 0], sizes = [16, 128], strides = [1, 1]} : vector<64x128xbf16> to vector<16x128xbf16>
    %c1_69 = arith.constant 1 : index
    %c0_70 = arith.constant 0 : index
    %c0_71 = arith.constant 0 : index
    %103 = vector.load %arg6[%c1_69, %c0_70, %c0_71] : memref<4x128x128xbf16, #tpu.memory_space<vmem>>, vector<1x128x128xbf16>
    %104 = vector.shape_cast %103 : vector<1x128x128xbf16> to vector<128x128xbf16>
    %cst_72 = arith.constant dense<0.000000e+00> : vector<16x128xf32>
    %105 = tpu.matmul %102, %104, %cst_72 {dimension_numbers = #tpu.dot_dimension_numbers<[1], [0], [0], [1], [0, 0, 1, 1], [], []>} : vector<16x128xbf16>, vector<128x128xbf16>, vector<16x128xf32> -> vector<16x128xf32>
    %106 = arith.addf %101, %105 : vector<16x128xf32>
    %107 = vector.extract_strided_slice %97 {offsets = [32, 0], sizes = [16, 128], strides = [1, 1]} : vector<64x128xbf16> to vector<16x128xbf16>
    %c2_73 = arith.constant 2 : index
    %c0_74 = arith.constant 0 : index
    %c0_75 = arith.constant 0 : index
    %108 = vector.load %arg6[%c2_73, %c0_74, %c0_75] : memref<4x128x128xbf16, #tpu.memory_space<vmem>>, vector<1x128x128xbf16>
    %109 = vector.shape_cast %108 : vector<1x128x128xbf16> to vector<128x128xbf16>
    %cst_76 = arith.constant dense<0.000000e+00> : vector<16x128xf32>
    %110 = tpu.matmul %107, %109, %cst_76 {dimension_numbers = #tpu.dot_dimension_numbers<[1], [0], [0], [1], [0, 0, 1, 1], [], []>} : vector<16x128xbf16>, vector<128x128xbf16>, vector<16x128xf32> -> vector<16x128xf32>
    %111 = arith.addf %106, %110 : vector<16x128xf32>
    %112 = vector.extract_strided_slice %97 {offsets = [48, 0], sizes = [16, 128], strides = [1, 1]} : vector<64x128xbf16> to vector<16x128xbf16>
    %c3_77 = arith.constant 3 : index
    %c0_78 = arith.constant 0 : index
    %c0_79 = arith.constant 0 : index
    %113 = vector.load %arg6[%c3_77, %c0_78, %c0_79] : memref<4x128x128xbf16, #tpu.memory_space<vmem>>, vector<1x128x128xbf16>
    %114 = vector.shape_cast %113 : vector<1x128x128xbf16> to vector<128x128xbf16>
    %cst_80 = arith.constant dense<0.000000e+00> : vector<16x128xf32>
    %115 = tpu.matmul %112, %114, %cst_80 {dimension_numbers = #tpu.dot_dimension_numbers<[1], [0], [0], [1], [0, 0, 1, 1], [], []>} : vector<16x128xbf16>, vector<128x128xbf16>, vector<16x128xf32> -> vector<16x128xf32>
    %116 = arith.addf %111, %115 : vector<16x128xf32>
    %c0_81 = arith.constant 0 : index
    %c0_82 = arith.constant 0 : index
    %117 = vector.load %arg7[%c0_81, %c0_82] : memref<1x128xf32, #tpu.memory_space<vmem>>, vector<1x128xf32>
    %118 = vector.broadcast %117 : vector<1x128xf32> to vector<16x128xf32>
    %119 = arith.addf %116, %118 : vector<16x128xf32>
    %cst_83 = arith.constant 0.000000e+00 : f32
    %120 = vector.broadcast %cst_83 : f32 to vector<16x128xf32>
    %121 = arith.maximumf %119, %120 : vector<16x128xf32>
    %122 = arith.truncf %121 : vector<16x128xf32> to vector<16x128xbf16>
    %c0_84 = arith.constant 0 : index
    %c0_85 = arith.constant 0 : index
    %123 = vector.load %arg8[%c0_84, %c0_85] : memref<128x128xbf16, #tpu.memory_space<vmem>>, vector<128x128xbf16>
    %cst_86 = arith.constant dense<0.000000e+00> : vector<16x128xf32>
    %124 = tpu.matmul %122, %123, %cst_86 {dimension_numbers = #tpu.dot_dimension_numbers<[1], [0], [0], [1], [0, 0, 1, 1], [], []>} : vector<16x128xbf16>, vector<128x128xbf16>, vector<16x128xf32> -> vector<16x128xf32>
    %c0_87 = arith.constant 0 : index
    %c0_88 = arith.constant 0 : index
    %125 = vector.load %arg9[%c0_87, %c0_88] : memref<1x128xf32, #tpu.memory_space<vmem>>, vector<1x128xf32>
    %126 = vector.broadcast %125 : vector<1x128xf32> to vector<16x128xf32>
    %127 = arith.addf %124, %126 : vector<16x128xf32>
    %cst_89 = arith.constant dense<0xFF800000> : vector<16xf32>
    %128 = vector.multi_reduction <maximumf>, %127, %cst_89 [1] : vector<16x128xf32> to vector<16xf32>
    %129 = vector.shape_cast %128 : vector<16xf32> to vector<16x1xf32>
    %130 = vector.broadcast %129 : vector<16x1xf32> to vector<16x128xf32>
    %131 = arith.subf %127, %130 : vector<16x128xf32>
    %132 = math.exp %131 : vector<16x128xf32>
    %cst_90 = arith.constant dense<0.000000e+00> : vector<16xf32>
    %133 = vector.multi_reduction <add>, %132, %cst_90 [1] : vector<16x128xf32> to vector<16xf32>
    %134 = vector.shape_cast %133 : vector<16xf32> to vector<16x1xf32>
    %135 = math.log %134 : vector<16x1xf32>
    %136 = vector.broadcast %135 : vector<16x1xf32> to vector<16x128xf32>
    %137 = arith.subf %131, %136 : vector<16x128xf32>
    %c0_91 = arith.constant 0 : index
    %c0_92 = arith.constant 0 : index
    %138 = vector.load %arg10[%c0_91, %c0_92] : memref<16x128xf32, #tpu.memory_space<vmem>>, vector<16x128xf32>
    tpu.vector_store %arg10[%c0_91, %c0_92], %137 {strides = array<i32>} : memref<16x128xf32, #tpu.memory_space<vmem>>, vector<16x128xf32>,
    return
  }
  func.func @transform_0(%arg0: i32) -> (i32, i32, i32) {
    %c0_i32 = arith.constant 0 : i32
    %c0_i32_0 = arith.constant 0 : i32
    %c0_i32_1 = arith.constant 0 : i32
    return %c0_i32, %arg0, %c0_i32_0 : i32, i32, i32
  }
  func.func @transform_1(%arg0: i32) -> (i32, i32) {
    %c0_i32 = arith.constant 0 : i32
    %c0_i32_0 = arith.constant 0 : i32
    %c0_i32_1 = arith.constant 0 : i32
    return %c0_i32, %c0_i32_0 : i32, i32
  }
  func.func @transform_2(%arg0: i32) -> (i32, i32) {
    %c0_i32 = arith.constant 0 : i32
    %c0_i32_0 = arith.constant 0 : i32
    %c0_i32_1 = arith.constant 0 : i32
    return %c0_i32, %c0_i32_0 : i32, i32
  }
  func.func @transform_3(%arg0: i32) -> (i32, i32, i32) {
    %c0_i32 = arith.constant 0 : i32
    %c0_i32_0 = arith.constant 0 : i32
    %c0_i32_1 = arith.constant 0 : i32
    %c0_i32_2 = arith.constant 0 : i32
    return %c0_i32, %c0_i32_0, %c0_i32_1 : i32, i32, i32
  }
  func.func @transform_4(%arg0: i32) -> (i32, i32) {
    %c0_i32 = arith.constant 0 : i32
    %c0_i32_0 = arith.constant 0 : i32
    %c0_i32_1 = arith.constant 0 : i32
    return %c0_i32, %c0_i32_0 : i32, i32
  }
  func.func @transform_5(%arg0: i32) -> (i32, i32, i32) {
    %c0_i32 = arith.constant 0 : i32
    %c0_i32_0 = arith.constant 0 : i32
    %c0_i32_1 = arith.constant 0 : i32
    %c0_i32_2 = arith.constant 0 : i32
    return %c0_i32, %c0_i32_0, %c0_i32_1 : i32, i32, i32
  }
  func.func @transform_6(%arg0: i32) -> (i32, i32) {
    %c0_i32 = arith.constant 0 : i32
    %c0_i32_0 = arith.constant 0 : i32
    %c0_i32_1 = arith.constant 0 : i32
    return %c0_i32, %c0_i32_0 : i32, i32
  }
  func.func @transform_7(%arg0: i32) -> (i32, i32) {
    %c0_i32 = arith.constant 0 : i32
    %c0_i32_0 = arith.constant 0 : i32
    %c0_i32_1 = arith.constant 0 : i32
    return %c0_i32, %c0_i32_0 : i32, i32
  }
  func.func @transform_8(%arg0: i32) -> (i32, i32) {
    %c0_i32 = arith.constant 0 : i32
    %c0_i32_0 = arith.constant 0 : i32
    %c0_i32_1 = arith.constant 0 : i32
    return %c0_i32, %c0_i32_0 : i32, i32
  }
  func.func @transform_9(%arg0: i32) -> (i32, i32) {
    %c0_i32 = arith.constant 0 : i32
    %c0_i32_0 = arith.constant 0 : i32
    return %arg0, %c0_i32 : i32, i32
  }
}

</mosaic_0001>

<llo_original>
// kernel: net_forward.1
$region0: #{net_forward.1}
  #allocation0 [shape = 'u32[]', space=smem, size = 0x4, offset = 0x4, fixed_abs, tag = 'smem constant byte address 0x4 - core index']
  #allocation1 [shape = 'u32[72,128]{1,0:T(1,128)}', space=vmem, size = 0x9000, scoped, tag = 'internal scratch']
  %s0 = inlined_call_operand.vmem [shape: bf16[4,96,140], index: 0, kind: input, shape index: {}]
  %s1 = inlined_call_operand.vmem [shape: bf16[140,256], index: 1, kind: input, shape index: {}]
  %s2 = inlined_call_operand.vmem [shape: f32[1,128], index: 2, kind: input, shape index: {}]
  %s3 = inlined_call_operand.vmem [shape: bf16[5,128,256], index: 3, kind: input, shape index: {}]
  %s4 = inlined_call_operand.vmem [shape: f32[1,128], index: 4, kind: input, shape index: {}]
  %s5 = inlined_call_operand.vmem [shape: bf16[4,128,128], index: 5, kind: input, shape index: {}]
  %s6 = inlined_call_operand.vmem [shape: f32[1,128], index: 6, kind: input, shape index: {}]
  %s7 = inlined_call_operand.vmem [shape: bf16[128,128], index: 7, kind: input, shape index: {}]
  %s8 = inlined_call_operand.vmem [shape: f32[1,128], index: 8, kind: input, shape index: {}]
  %s9 = inlined_call_operand.hbm [shape: f32[16,128], index: 9, kind: output, shape index: {}]
  %s10 = sld [smem:[#allocation0]]
  $region46: #{net_forward.1} parent=0
    _
  %s12 = ssub.s32 1, %s10
  %s13 = scalar_select 0, %s12, %s10
  $region1: #{net_forward.1} parent=0
    #allocation2 [shape = 'u8[8192]{0}', space=vmem, size = 0x2000, scoped, tag = 'output window, operand 0, single buffered']
    #allocation3 [shape = 's32[1]{0}', space=sflag, size = 0x4, scoped, tag = 'scoped memory for net_forward.1']
    %14 = vsyncpa [#allocation3], 0
    // Predicated region
    $region2: #{net_forward.1} parent=1 // pred_check
      _
    $region3: #{net_forward.1} parent=1 // pred_check_branch
      %16 = sbr.rel (0) target = $region5
    $region4: #{net_forward.1} parent=1 // pred_region
      _
    $region5: #{net_forward.1} parent=1 // pred_fallthru
      _
    // Predicated region
    $region6: #{net_forward.1} parent=1 // pred_check
      _
    $region7: #{net_forward.1} parent=1 // pred_check_branch
      %18 = sbr.rel (0) target = $region9
    $region8: #{net_forward.1} parent=1 // pred_region
      _
    $region9: #{net_forward.1} parent=1 // pred_fallthru
      _
    // Predicated region
    $region10: #{net_forward.1} parent=1 // pred_check
      _
    $region11: #{net_forward.1} parent=1 // pred_check_branch
      %20 = sbr.rel (0) target = $region13
    $region12: #{net_forward.1} parent=1 // pred_region
      _
    $region13: #{net_forward.1} parent=1 // pred_fallthru
      _
    // Predicated region
    $region14: #{net_forward.1} parent=1 // pred_check
      _
    $region15: #{net_forward.1} parent=1 // pred_check_branch
      %22 = sbr.rel (0) target = $region17
    $region16: #{net_forward.1} parent=1 // pred_region
      _
    $region17: #{net_forward.1} parent=1 // pred_fallthru
      _
    // Predicated region
    $region18: #{net_forward.1} parent=1 // pred_check
      _
    $region19: #{net_forward.1} parent=1 // pred_check_branch
      %24 = sbr.rel (0) target = $region21
    $region20: #{net_forward.1} parent=1 // pred_region
      _
    $region21: #{net_forward.1} parent=1 // pred_fallthru
      _
    // Predicated region
    $region22: #{net_forward.1} parent=1 // pred_check
      _
    $region23: #{net_forward.1} parent=1 // pred_check_branch
      %26 = sbr.rel (0) target = $region25
    $region24: #{net_forward.1} parent=1 // pred_region
      _
    $region25: #{net_forward.1} parent=1 // pred_fallthru
      _
    // Predicated region
    $region26: #{net_forward.1} parent=1 // pred_check
      _
    $region27: #{net_forward.1} parent=1 // pred_check_branch
      %28 = sbr.rel (0) target = $region29
    $region28: #{net_forward.1} parent=1 // pred_region
      _
    $region29: #{net_forward.1} parent=1 // pred_fallthru
      _
    // Predicated region
    $region30: #{net_forward.1} parent=1 // pred_check
      _
    $region31: #{net_forward.1} parent=1 // pred_check_branch
      %30 = sbr.rel (0) target = $region33
    $region32: #{net_forward.1} parent=1 // pred_region
      _
    $region33: #{net_forward.1} parent=1 // pred_fallthru
      _
    // Predicated region
    $region34: #{net_forward.1} parent=1 // pred_check
      _
    $region35: #{net_forward.1} parent=1 // pred_check_branch
      %32 = sbr.rel (0) target = $region37
    $region36: #{net_forward.1} parent=1 // pred_region
      _
    $region37: #{net_forward.1} parent=1 // pred_fallthru
      _
    %v34 = vld [vmem:[%s2] sm:$0x1]
    %v35 = vld [vmem:[%s0] sm:$0xff]
    %v36 = vld [vmem:[%s0 + $0x8] sm:$0xff]
    %v37 = vld [vmem:[%s0 + $0x10] sm:$0xff]
    %v38 = vld [vmem:[%s0 + $0x18] sm:$0xff]
    %v39 = vld [vmem:[%s0 + $0x20] sm:$0xff]
    %v40 = vld [vmem:[%s0 + $0x28] sm:$0xff]
    %v41 = vld [vmem:[%s0 + $0x30] sm:$0xff]
    %v42 = vld [vmem:[%s0 + $0x38] sm:$0xff]
    %v43 = vld [vmem:[%s0 + $0x40] sm:$0xff]
    %v44 = vld [vmem:[%s0 + $0x48] sm:$0xff]
    %v45 = vld [vmem:[%s0 + $0x50] sm:$0xff]
    %v46 = vld [vmem:[%s0 + $0x58] sm:$0xff]
    %v47 = vld [vmem:[%s1] sm:$0xff]
    %v48 = vld [vmem:[%s1 + $0x8] sm:$0xff]
    %v49 = vld [vmem:[%s1 + $0x10] sm:$0xff]
    %v50 = vld [vmem:[%s1 + $0x18] sm:$0xff]
    %v51 = vld [vmem:[%s1 + $0x20] sm:$0xff]
    %v52 = vld [vmem:[%s1 + $0x28] sm:$0xff]
    %v53 = vld [vmem:[%s1 + $0x30] sm:$0xff]
    %v54 = vld [vmem:[%s1 + $0x38] sm:$0xff]
    %v55 = vld [vmem:[%s1 + $0x40] sm:$0xff]
    %v56 = vld [vmem:[%s1 + $0x48] sm:$0xff]
    %v57 = vld [vmem:[%s1 + $0x50] sm:$0xff]
    %v58 = vld [vmem:[%s1 + $0x58] sm:$0xff]
    %v59 = vld [vmem:[%s1 + $0x60] sm:$0xff]
    %v60 = vld [vmem:[%s1 + $0x68] sm:$0xff]
    %v61 = vld [vmem:[%s1 + $0x70] sm:$0xff]
    %v62 = vld [vmem:[%s1 + $0x78] sm:$0xff]
    %v63 = vld [vmem:[%s1 + $0x80] sm:$0xff]
    %v64 = vld [vmem:[%s1 + $0x88] sm:$0x33]
    %v77 = vunpack.c.l.b16 %v35
    %v78 = vunpack.c.h.b16 %v35
    %v79 = vunpack.c.l.b16 %v36
    %v80 = vunpack.c.h.b16 %v36
    %v81 = vunpack.c.l.b16 %v37
    %v82 = vunpack.c.h.b16 %v37
    %v83 = vunpack.c.l.b16 %v38
    %v84 = vunpack.c.h.b16 %v38
    %v85 = vunpack.c.l.b16 %v39
    %v86 = vunpack.c.h.b16 %v39
    %v87 = vunpack.c.l.b16 %v40
    %v88 = vunpack.c.h.b16 %v40
    %v89 = vunpack.c.l.b16 %v41
    %v90 = vunpack.c.h.b16 %v41
    %v91 = vunpack.c.l.b16 %v42
    %v92 = vunpack.c.h.b16 %v42
    %v93 = vunpack.c.l.b16 %v43
    %v94 = vunpack.c.h.b16 %v43
    %v95 = vunpack.c.l.b16 %v44
    %v96 = vunpack.c.h.b16 %v44
    %v97 = vunpack.c.l.b16 %v45
    %v98 = vunpack.c.h.b16 %v45
    %v99 = vunpack.c.l.b16 %v46
    %v100 = vunpack.c.h.b16 %v46
    %v101 = vpack.c.b16 %v79, %v77
    %v102 = vpack.c.b16 %v80, %v78
    %v103 = vpack.c.b16 %v83, %v81
    %v104 = vpack.c.b16 %v84, %v82
    %v105 = vpack.c.b16 %v87, %v85
    %v106 = vpack.c.b16 %v88, %v86
    %v107 = vpack.c.b16 %v91, %v89
    %v108 = vpack.c.b16 %v92, %v90
    %v109 = vpack.c.b16 %v95, %v93
    %v110 = vpack.c.b16 %v96, %v94
    %v111 = vpack.c.b16 %v99, %v97
    %v112 = vpack.c.b16 %v100, %v98
    %v137 = vunpack.c.l.b16 %v47
    %v138 = vunpack.c.h.b16 %v47
    %v139 = vunpack.c.l.b16 %v48
    %v140 = vunpack.c.h.b16 %v48
    %v141 = vunpack.c.l.b16 %v49
    %v142 = vunpack.c.h.b16 %v49
    %v143 = vunpack.c.l.b16 %v50
    %v144 = vunpack.c.h.b16 %v50
    %v145 = vunpack.c.l.b16 %v51
    %v146 = vunpack.c.h.b16 %v51
    %v147 = vunpack.c.l.b16 %v52
    %v148 = vunpack.c.h.b16 %v52
    %v149 = vunpack.c.l.b16 %v53
    %v150 = vunpack.c.h.b16 %v53
    %v151 = vunpack.c.l.b16 %v54
    %v152 = vunpack.c.h.b16 %v54
    %v153 = vunpack.c.l.b16 %v55
    %v154 = vunpack.c.h.b16 %v55
    %v155 = vunpack.c.l.b16 %v56
    %v156 = vunpack.c.h.b16 %v56
    %v157 = vunpack.c.l.b16 %v57
    %v158 = vunpack.c.h.b16 %v57
    %v159 = vunpack.c.l.b16 %v58
    %v160 = vunpack.c.h.b16 %v58
    %v161 = vunpack.c.l.b16 %v59
    %v162 = vunpack.c.h.b16 %v59
    %v163 = vunpack.c.l.b16 %v60
    %v164 = vunpack.c.h.b16 %v60
    %v165 = vunpack.c.l.b16 %v61
    %v166 = vunpack.c.h.b16 %v61
    %v167 = vunpack.c.l.b16 %v62
    %v168 = vunpack.c.h.b16 %v62
    %v169 = vunpack.c.l.b16 %v63
    %v170 = vunpack.c.h.b16 %v63
    %v171 = vunpack.c.l.b16 %v64
    %v172 = vunpack.c.h.b16 %v64
    %v173 = vpack.c.b16 %v139, %v137
    %v174 = vpack.c.b16 %v140, %v138
    %v175 = vpack.c.b16 %v143, %v141
    %v176 = vpack.c.b16 %v144, %v142
    %v177 = vpack.c.b16 %v147, %v145
    %v178 = vpack.c.b16 %v148, %v146
    %v179 = vpack.c.b16 %v151, %v149
    %v180 = vpack.c.b16 %v152, %v150
    %v181 = vpack.c.b16 %v155, %v153
    %v182 = vpack.c.b16 %v156, %v154
    %v183 = vpack.c.b16 %v159, %v157
    %v184 = vpack.c.b16 %v160, %v158
    %v185 = vpack.c.b16 %v163, %v161
    %v186 = vpack.c.b16 %v164, %v162
    %v187 = vpack.c.b16 %v167, %v165
    %v188 = vpack.c.b16 %v168, %v166
    %v189 = vpack.c.b16 %v171, %v169
    %v190 = vpack.c.b16 %v172, %v170
    %vm207 = vcmask 97280
    %v209 = vsel %vm207, %v102, 0
    %v212 = vsel %vm207, %v104, 0
    %v215 = vsel %vm207, %v106, 0
    %v218 = vsel %vm207, %v108, 0
    %v221 = vsel %vm207, %v110, 0
    %v224 = vsel %vm207, %v112, 0
    %vm226 = vcmask 1045504
    %v228 = vsel %vm226, %v189, 0
    %v231 = vsel %vm226, %v190, 0
    %233 = vmatpush.bf16.msra.mxu0 %v187
    %234 = vmatpush.bf16.msra.mxu0 %v185
    %235 = vmatpush.bf16.msra.mxu0 %v183
    %236 = vmatpush.bf16.msra.mxu0 %v181
    %237 = vmatpush.bf16.msra.mxu0 %v179
    %238 = vmatpush.bf16.msra.mxu0 %v177
    %239 = vmatpush.bf16.msra.mxu0 %v175
    %240 = vmatpush.bf16.msra.mxu0 %v173
    %241 = vmatmul.bf16.gmra.mxu0 %v101
    %v242 = vpop.f32.mrf.mxu0
    %v243 = vadd.f32 0.0, %v242
    %v244 = vpop.f32.mrf.mxu0
    %v245 = vadd.f32 0.0, %v244
    %246 = vmatmul.bf16.gmra.mxu0 %v103
    %v247 = vpop.f32.mrf.mxu0
    %v248 = vadd.f32 0.0, %v247
    %v249 = vpop.f32.mrf.mxu0
    %v250 = vadd.f32 0.0, %v249
    %251 = vmatmul.bf16.gmra.mxu0 %v105
    %v252 = vpop.f32.mrf.mxu0
    %v253 = vadd.f32 0.0, %v252
    %v254 = vpop.f32.mrf.mxu0
    %v255 = vadd.f32 0.0, %v254
    %256 = vmatmul.bf16.gmra.mxu0 %v107
    %v257 = vpop.f32.mrf.mxu0
    %v258 = vadd.f32 0.0, %v257
    %v259 = vpop.f32.mrf.mxu0
    %v260 = vadd.f32 0.0, %v259
    %261 = vmatmul.bf16.gmra.mxu0 %v109
    %v262 = vpop.f32.mrf.mxu0
    %v263 = vadd.f32 0.0, %v262
    %v264 = vpop.f32.mrf.mxu0
    %v265 = vadd.f32 0.0, %v264
    %266 = vmatmul.bf16.gmra.mxu0 %v111
    %v267 = vpop.f32.mrf.mxu0
    %v268 = vadd.f32 0.0, %v267
    %v269 = vpop.f32.mrf.mxu0
    %v270 = vadd.f32 0.0, %v269
    %271 = vdwg.mxu0
    %272 = vmatpush.bf16.msra.mxu0 0
    %273 = vmatpush.bf16.msra.mxu0 0
    %274 = vmatpush.bf16.msra.mxu0 0
    %275 = vmatpush.bf16.msra.mxu0 0
    %276 = vmatpush.bf16.msra.mxu0 0
    %277 = vmatpush.bf16.msra.mxu0 0
    %278 = vmatpush.bf16.msra.mxu0 0
    %279 = vmatpush.bf16.msra.mxu0 %v228
    %280 = vmatmul.bf16.gmra.mxu0 %v209
    %v281 = vpop.f32.mrf.mxu0
    %v282 = vadd.f32 %v243, %v281
    %v283 = vpop.f32.mrf.mxu0
    %v284 = vadd.f32 %v245, %v283
    %285 = vmatmul.bf16.gmra.mxu0 %v212
    %v286 = vpop.f32.mrf.mxu0
    %v287 = vadd.f32 %v248, %v286
    %v288 = vpop.f32.mrf.mxu0
    %v289 = vadd.f32 %v250, %v288
    %290 = vmatmul.bf16.gmra.mxu0 %v215
    %v291 = vpop.f32.mrf.mxu0
    %v292 = vadd.f32 %v253, %v291
    %v293 = vpop.f32.mrf.mxu0
    %v294 = vadd.f32 %v255, %v293
    %295 = vmatmul.bf16.gmra.mxu0 %v218
    %v296 = vpop.f32.mrf.mxu0
    %v297 = vadd.f32 %v258, %v296
    %v298 = vpop.f32.mrf.mxu0
    %v299 = vadd.f32 %v260, %v298
    %300 = vmatmul.bf16.gmra.mxu0 %v221
    %v301 = vpop.f32.mrf.mxu0
    %v302 = vadd.f32 %v263, %v301
    %v303 = vpop.f32.mrf.mxu0
    %v304 = vadd.f32 %v265, %v303
    %305 = vmatmul.bf16.gmra.mxu0 %v224
    %v306 = vpop.f32.mrf.mxu0
    %v307 = vadd.f32 %v268, %v306
    %v308 = vpop.f32.mrf.mxu0
    %v309 = vadd.f32 %v270, %v308
    %310 = vdwg.mxu0
    %311 = vmatpush.bf16.msra.mxu0 %v188
    %312 = vmatpush.bf16.msra.mxu0 %v186
    %313 = vmatpush.bf16.msra.mxu0 %v184
    %314 = vmatpush.bf16.msra.mxu0 %v182
    %315 = vmatpush.bf16.msra.mxu0 %v180
    %316 = vmatpush.bf16.msra.mxu0 %v178
    %317 = vmatpush.bf16.msra.mxu0 %v176
    %318 = vmatpush.bf16.msra.mxu0 %v174
    %319 = vmatmul.bf16.gmra.mxu0 %v101
    %v320 = vpop.f32.mrf.mxu0
    %v321 = vadd.f32 0.0, %v320
    %v322 = vpop.f32.mrf.mxu0
    %v323 = vadd.f32 0.0, %v322
    %324 = vmatmul.bf16.gmra.mxu0 %v103
    %v325 = vpop.f32.mrf.mxu0
    %v326 = vadd.f32 0.0, %v325
    %v327 = vpop.f32.mrf.mxu0
    %v328 = vadd.f32 0.0, %v327
    %329 = vmatmul.bf16.gmra.mxu0 %v105
    %v330 = vpop.f32.mrf.mxu0
    %v331 = vadd.f32 0.0, %v330
    %v332 = vpop.f32.mrf.mxu0
    %v333 = vadd.f32 0.0, %v332
    %334 = vmatmul.bf16.gmra.mxu0 %v107
    %v335 = vpop.f32.mrf.mxu0
    %v336 = vadd.f32 0.0, %v335
    %v337 = vpop.f32.mrf.mxu0
    %v338 = vadd.f32 0.0, %v337
    %339 = vmatmul.bf16.gmra.mxu0 %v109
    %v340 = vpop.f32.mrf.mxu0
    %v341 = vadd.f32 0.0, %v340
    %v342 = vpop.f32.mrf.mxu0
    %v343 = vadd.f32 0.0, %v342
    %344 = vmatmul.bf16.gmra.mxu0 %v111
    %v345 = vpop.f32.mrf.mxu0
    %v346 = vadd.f32 0.0, %v345
    %v347 = vpop.f32.mrf.mxu0
    %v348 = vadd.f32 0.0, %v347
    %349 = vdwg.mxu0
    %350 = vmatpush.bf16.msra.mxu0 0
    %351 = vmatpush.bf16.msra.mxu0 0
    %352 = vmatpush.bf16.msra.mxu0 0
    %353 = vmatpush.bf16.msra.mxu0 0
    %354 = vmatpush.bf16.msra.mxu0 0
    %355 = vmatpush.bf16.msra.mxu0 0
    %356 = vmatpush.bf16.msra.mxu0 0
    %357 = vmatpush.bf16.msra.mxu0 %v231
    %358 = vmatmul.bf16.gmra.mxu0 %v209
    %v359 = vpop.f32.mrf.mxu0
    %v360 = vadd.f32 %v321, %v359
    %v361 = vpop.f32.mrf.mxu0
    %v362 = vadd.f32 %v323, %v361
    %363 = vmatmul.bf16.gmra.mxu0 %v212
    %v364 = vpop.f32.mrf.mxu0
    %v365 = vadd.f32 %v326, %v364
    %v366 = vpop.f32.mrf.mxu0
    %v367 = vadd.f32 %v328, %v366
    %368 = vmatmul.bf16.gmra.mxu0 %v215
    %v369 = vpop.f32.mrf.mxu0
    %v370 = vadd.f32 %v331, %v369
    %v371 = vpop.f32.mrf.mxu0
    %v372 = vadd.f32 %v333, %v371
    %373 = vmatmul.bf16.gmra.mxu0 %v218
    %v374 = vpop.f32.mrf.mxu0
    %v375 = vadd.f32 %v336, %v374
    %v376 = vpop.f32.mrf.mxu0
    %v377 = vadd.f32 %v338, %v376
    %378 = vmatmul.bf16.gmra.mxu0 %v221
    %v379 = vpop.f32.mrf.mxu0
    %v380 = vadd.f32 %v341, %v379
    %v381 = vpop.f32.mrf.mxu0
    %v382 = vadd.f32 %v343, %v381
    %383 = vmatmul.bf16.gmra.mxu0 %v224
    %v384 = vpop.f32.mrf.mxu0
    %v385 = vadd.f32 %v346, %v384
    %v386 = vpop.f32.mrf.mxu0
    %v387 = vadd.f32 %v348, %v386
    %388 = vdwg.mxu0
    %v389 = vmax.f32 %v282, %v360
    %v390 = vmax.f32 %v284, %v362
    %v391 = vmax.f32 %v287, %v365
    %v392 = vmax.f32 %v289, %v367
    %v393 = vmax.f32 %v292, %v370
    %v394 = vmax.f32 %v294, %v372
    %v395 = vmax.f32 %v297, %v375
    %v396 = vmax.f32 %v299, %v377
    %v397 = vmax.f32 %v302, %v380
    %v398 = vmax.f32 %v304, %v382
    %v399 = vmax.f32 %v307, %v385
    %v400 = vmax.f32 %v309, %v387
    %s401 = scalar_lea.vmem %s0, 96
    %v402 = vld [vmem:[%s401] sm:$0xff]
    %v403 = vld [vmem:[%s401 + $0x8] sm:$0xff]
    %v404 = vld [vmem:[%s401 + $0x10] sm:$0xff]
    %v405 = vld [vmem:[%s401 + $0x18] sm:$0xff]
    %v406 = vld [vmem:[%s401 + $0x20] sm:$0xff]
    %v407 = vld [vmem:[%s401 + $0x28] sm:$0xff]
    %v408 = vld [vmem:[%s401 + $0x30] sm:$0xff]
    %v409 = vld [vmem:[%s401 + $0x38] sm:$0xff]
    %v410 = vld [vmem:[%s401 + $0x40] sm:$0xff]
    %v411 = vld [vmem:[%s401 + $0x48] sm:$0xff]
    %v412 = vld [vmem:[%s401 + $0x50] sm:$0xff]
    %v413 = vld [vmem:[%s401 + $0x58] sm:$0xff]
    %v426 = vunpack.c.l.b16 %v402
    %v427 = vunpack.c.h.b16 %v402
    %v428 = vunpack.c.l.b16 %v403
    %v429 = vunpack.c.h.b16 %v403
    %v430 = vunpack.c.l.b16 %v404
    %v431 = vunpack.c.h.b16 %v404
    %v432 = vunpack.c.l.b16 %v405
    %v433 = vunpack.c.h.b16 %v405
    %v434 = vunpack.c.l.b16 %v406
    %v435 = vunpack.c.h.b16 %v406
    %v436 = vunpack.c.l.b16 %v407
    %v437 = vunpack.c.h.b16 %v407
    %v438 = vunpack.c.l.b16 %v408
    %v439 = vunpack.c.h.b16 %v408
    %v440 = vunpack.c.l.b16 %v409
    %v441 = vunpack.c.h.b16 %v409
    %v442 = vunpack.c.l.b16 %v410
    %v443 = vunpack.c.h.b16 %v410
    %v444 = vunpack.c.l.b16 %v411
    %v445 = vunpack.c.h.b16 %v411
    %v446 = vunpack.c.l.b16 %v412
    %v447 = vunpack.c.h.b16 %v412
    %v448 = vunpack.c.l.b16 %v413
    %v449 = vunpack.c.h.b16 %v413
    %v450 = vpack.c.b16 %v428, %v426
    %v451 = vpack.c.b16 %v429, %v427
    %v452 = vpack.c.b16 %v432, %v430
    %v453 = vpack.c.b16 %v433, %v431
    %v454 = vpack.c.b16 %v436, %v434
    %v455 = vpack.c.b16 %v437, %v435
    %v456 = vpack.c.b16 %v440, %v438
    %v457 = vpack.c.b16 %v441, %v439
    %v458 = vpack.c.b16 %v444, %v442
    %v459 = vpack.c.b16 %v445, %v443
    %v460 = vpack.c.b16 %v448, %v446
    %v461 = vpack.c.b16 %v449, %v447
    %v469 = vsel %vm207, %v451, 0
    %v472 = vsel %vm207, %v453, 0
    %v475 = vsel %vm207, %v455, 0
    %v478 = vsel %vm207, %v457, 0
    %v481 = vsel %vm207, %v459, 0
    %v484 = vsel %vm207, %v461, 0
    %486 = vmatpush.bf16.msra.mxu0 %v187
    %487 = vmatpush.bf16.msra.mxu0 %v185
    %488 = vmatpush.bf16.msra.mxu0 %v183
    %489 = vmatpush.bf16.msra.mxu0 %v181
    %490 = vmatpush.bf16.msra.mxu0 %v179
    %491 = vmatpush.bf16.msra.mxu0 %v177
    %492 = vmatpush.bf16.msra.mxu0 %v175
    %493 = vmatpush.bf16.msra.mxu0 %v173
    %494 = vmatmul.bf16.gmra.mxu0 %v450
    %v495 = vpop.f32.mrf.mxu0
    %v496 = vadd.f32 0.0, %v495
    %v497 = vpop.f32.mrf.mxu0
    %v498 = vadd.f32 0.0, %v497
    %499 = vmatmul.bf16.gmra.mxu0 %v452
    %v500 = vpop.f32.mrf.mxu0
    %v501 = vadd.f32 0.0, %v500
    %v502 = vpop.f32.mrf.mxu0
    %v503 = vadd.f32 0.0, %v502
    %504 = vmatmul.bf16.gmra.mxu0 %v454
    %v505 = vpop.f32.mrf.mxu0
    %v506 = vadd.f32 0.0, %v505
    %v507 = vpop.f32.mrf.mxu0
    %v508 = vadd.f32 0.0, %v507
    %509 = vmatmul.bf16.gmra.mxu0 %v456
    %v510 = vpop.f32.mrf.mxu0
    %v511 = vadd.f32 0.0, %v510
    %v512 = vpop.f32.mrf.mxu0
    %v513 = vadd.f32 0.0, %v512
    %514 = vmatmul.bf16.gmra.mxu0 %v458
    %v515 = vpop.f32.mrf.mxu0
    %v516 = vadd.f32 0.0, %v515
    %v517 = vpop.f32.mrf.mxu0
    %v518 = vadd.f32 0.0, %v517
    %519 = vmatmul.bf16.gmra.mxu0 %v460
    %v520 = vpop.f32.mrf.mxu0
    %v521 = vadd.f32 0.0, %v520
    %v522 = vpop.f32.mrf.mxu0
    %v523 = vadd.f32 0.0, %v522
    %524 = vdwg.mxu0
    %525 = vmatpush.bf16.msra.mxu0 0
    %526 = vmatpush.bf16.msra.mxu0 0
    %527 = vmatpush.bf16.msra.mxu0 0
    %528 = vmatpush.bf16.msra.mxu0 0
    %529 = vmatpush.bf16.msra.mxu0 0
    %530 = vmatpush.bf16.msra.mxu0 0
    %531 = vmatpush.bf16.msra.mxu0 0
    %532 = vmatpush.bf16.msra.mxu0 %v228
    %533 = vmatmul.bf16.gmra.mxu0 %v469
    %v534 = vpop.f32.mrf.mxu0
    %v535 = vadd.f32 %v496, %v534
    %v536 = vpop.f32.mrf.mxu0
    %v537 = vadd.f32 %v498, %v536
    %538 = vmatmul.bf16.gmra.mxu0 %v472
    %v539 = vpop.f32.mrf.mxu0
    %v540 = vadd.f32 %v501, %v539
    %v541 = vpop.f32.mrf.mxu0
    %v542 = vadd.f32 %v503, %v541
    %543 = vmatmul.bf16.gmra.mxu0 %v475
    %v544 = vpop.f32.mrf.mxu0
    %v545 = vadd.f32 %v506, %v544
    %v546 = vpop.f32.mrf.mxu0
    %v547 = vadd.f32 %v508, %v546
    %548 = vmatmul.bf16.gmra.mxu0 %v478
    %v549 = vpop.f32.mrf.mxu0
    %v550 = vadd.f32 %v511, %v549
    %v551 = vpop.f32.mrf.mxu0
    %v552 = vadd.f32 %v513, %v551
    %553 = vmatmul.bf16.gmra.mxu0 %v481
    %v554 = vpop.f32.mrf.mxu0
    %v555 = vadd.f32 %v516, %v554
    %v556 = vpop.f32.mrf.mxu0
    %v557 = vadd.f32 %v518, %v556
    %558 = vmatmul.bf16.gmra.mxu0 %v484
    %v559 = vpop.f32.mrf.mxu0
    %v560 = vadd.f32 %v521, %v559
    %v561 = vpop.f32.mrf.mxu0
    %v562 = vadd.f32 %v523, %v561
    %563 = vdwg.mxu0
    %564 = vmatpush.bf16.msra.mxu0 %v188
    %565 = vmatpush.bf16.msra.mxu0 %v186
    %566 = vmatpush.bf16.msra.mxu0 %v184
    %567 = vmatpush.bf16.msra.mxu0 %v182
    %568 = vmatpush.bf16.msra.mxu0 %v180
    %569 = vmatpush.bf16.msra.mxu0 %v178
    %570 = vmatpush.bf16.msra.mxu0 %v176
    %571 = vmatpush.bf16.msra.mxu0 %v174
    %572 = vmatmul.bf16.gmra.mxu0 %v450
    %v573 = vpop.f32.mrf.mxu0
    %v574 = vadd.f32 0.0, %v573
    %v575 = vpop.f32.mrf.mxu0
    %v576 = vadd.f32 0.0, %v575
    %577 = vmatmul.bf16.gmra.mxu0 %v452
    %v578 = vpop.f32.mrf.mxu0
    %v579 = vadd.f32 0.0, %v578
    %v580 = vpop.f32.mrf.mxu0
    %v581 = vadd.f32 0.0, %v580
    %582 = vmatmul.bf16.gmra.mxu0 %v454
    %v583 = vpop.f32.mrf.mxu0
    %v584 = vadd.f32 0.0, %v583
    %v585 = vpop.f32.mrf.mxu0
    %v586 = vadd.f32 0.0, %v585
    %587 = vmatmul.bf16.gmra.mxu0 %v456
    %v588 = vpop.f32.mrf.mxu0
    %v589 = vadd.f32 0.0, %v588
    %v590 = vpop.f32.mrf.mxu0
    %v591 = vadd.f32 0.0, %v590
    %592 = vmatmul.bf16.gmra.mxu0 %v458
    %v593 = vpop.f32.mrf.mxu0
    %v594 = vadd.f32 0.0, %v593
    %v595 = vpop.f32.mrf.mxu0
    %v596 = vadd.f32 0.0, %v595
    %597 = vmatmul.bf16.gmra.mxu0 %v460
    %v598 = vpop.f32.mrf.mxu0
    %v599 = vadd.f32 0.0, %v598
    %v600 = vpop.f32.mrf.mxu0
    %v601 = vadd.f32 0.0, %v600
    %602 = vdwg.mxu0
    %603 = vmatpush.bf16.msra.mxu0 0
    %604 = vmatpush.bf16.msra.mxu0 0
    %605 = vmatpush.bf16.msra.mxu0 0
    %606 = vmatpush.bf16.msra.mxu0 0
    %607 = vmatpush.bf16.msra.mxu0 0
    %608 = vmatpush.bf16.msra.mxu0 0
    %609 = vmatpush.bf16.msra.mxu0 0
    %610 = vmatpush.bf16.msra.mxu0 %v231
    %611 = vmatmul.bf16.gmra.mxu0 %v469
    %v612 = vpop.f32.mrf.mxu0
    %v613 = vadd.f32 %v574, %v612
    %v614 = vpop.f32.mrf.mxu0
    %v615 = vadd.f32 %v576, %v614
    %616 = vmatmul.bf16.gmra.mxu0 %v472
    %v617 = vpop.f32.mrf.mxu0
    %v618 = vadd.f32 %v579, %v617
    %v619 = vpop.f32.mrf.mxu0
    %v620 = vadd.f32 %v581, %v619
    %621 = vmatmul.bf16.gmra.mxu0 %v475
    %v622 = vpop.f32.mrf.mxu0
    %v623 = vadd.f32 %v584, %v622
    %v624 = vpop.f32.mrf.mxu0
    %v625 = vadd.f32 %v586, %v624
    %626 = vmatmul.bf16.gmra.mxu0 %v478
    %v627 = vpop.f32.mrf.mxu0
    %v628 = vadd.f32 %v589, %v627
    %v629 = vpop.f32.mrf.mxu0
    %v630 = vadd.f32 %v591, %v629
    %631 = vmatmul.bf16.gmra.mxu0 %v481
    %v632 = vpop.f32.mrf.mxu0
    %v633 = vadd.f32 %v594, %v632
    %v634 = vpop.f32.mrf.mxu0
    %v635 = vadd.f32 %v596, %v634
    %636 = vmatmul.bf16.gmra.mxu0 %v484
    %v637 = vpop.f32.mrf.mxu0
    %v638 = vadd.f32 %v599, %v637
    %v639 = vpop.f32.mrf.mxu0
    %v640 = vadd.f32 %v601, %v639
    %641 = vdwg.mxu0
    %v642 = vmax.f32 %v535, %v613
    %v643 = vmax.f32 %v537, %v615
    %v644 = vmax.f32 %v540, %v618
    %v645 = vmax.f32 %v542, %v620
    %v646 = vmax.f32 %v545, %v623
    %v647 = vmax.f32 %v547, %v625
    %v648 = vmax.f32 %v550, %v628
    %v649 = vmax.f32 %v552, %v630
    %v650 = vmax.f32 %v555, %v633
    %v651 = vmax.f32 %v557, %v635
    %v652 = vmax.f32 %v560, %v638
    %v653 = vmax.f32 %v562, %v640
    %v654 = vmax.f32 %v389, %v642
    %v655 = vmax.f32 %v390, %v643
    %v656 = vmax.f32 %v391, %v644
    %v657 = vmax.f32 %v392, %v645
    %v658 = vmax.f32 %v393, %v646
    %v659 = vmax.f32 %v394, %v647
    %v660 = vmax.f32 %v395, %v648
    %v661 = vmax.f32 %v396, %v649
    %v662 = vmax.f32 %v397, %v650
    %v663 = vmax.f32 %v398, %v651
    %v664 = vmax.f32 %v399, %v652
    %v665 = vmax.f32 %v400, %v653
    %v667 = vperm.slane %v34, 0
    %v669 = vadd.f32 %v654, %v667
    %v670 = vadd.f32 %v655, %v667
    %v671 = vadd.f32 %v656, %v667
    %v672 = vadd.f32 %v657, %v667
    %v673 = vadd.f32 %v658, %v667
    %v674 = vadd.f32 %v659, %v667
    %v675 = vadd.f32 %v660, %v667
    %v676 = vadd.f32 %v661, %v667
    %v677 = vadd.f32 %v662, %v667
    %v678 = vadd.f32 %v663, %v667
    %v679 = vadd.f32 %v664, %v667
    %v680 = vadd.f32 %v665, %v667
    %v681 = vmax.f32 %v669, 0.0
    %v682 = vmax.f32 %v670, 0.0
    %v683 = vmax.f32 %v671, 0.0
    %v684 = vmax.f32 %v672, 0.0
    %v685 = vmax.f32 %v673, 0.0
    %v686 = vmax.f32 %v674, 0.0
    %v687 = vmax.f32 %v675, 0.0
    %v688 = vmax.f32 %v676, 0.0
    %v689 = vmax.f32 %v677, 0.0
    %v690 = vmax.f32 %v678, 0.0
    %v691 = vmax.f32 %v679, 0.0
    %v692 = vmax.f32 %v680, 0.0
    %v693 = vpack.c.bf16 %v681, %v681
    %v694 = vpack.c.bf16 %v682, %v682
    %v695 = vpack.c.bf16 %v683, %v683
    %v696 = vpack.c.bf16 %v684, %v684
    %v697 = vpack.c.bf16 %v685, %v685
    %v698 = vpack.c.bf16 %v686, %v686
    %v699 = vpack.c.bf16 %v687, %v687
    %v700 = vpack.c.bf16 %v688, %v688
    %v701 = vpack.c.bf16 %v689, %v689
    %v702 = vpack.c.bf16 %v690, %v690
    %v703 = vpack.c.bf16 %v691, %v691
    %v704 = vpack.c.bf16 %v692, %v692
    %s705 = scalar_lea.vmem %s0, 192
    %v706 = vld [vmem:[%s705] sm:$0xff]
    %v707 = vld [vmem:[%s705 + $0x8] sm:$0xff]
    %v708 = vld [vmem:[%s705 + $0x10] sm:$0xff]
    %v709 = vld [vmem:[%s705 + $0x18] sm:$0xff]
    %v710 = vld [vmem:[%s705 + $0x20] sm:$0xff]
    %v711 = vld [vmem:[%s705 + $0x28] sm:$0xff]
    %v712 = vld [vmem:[%s705 + $0x30] sm:$0xff]
    %v713 = vld [vmem:[%s705 + $0x38] sm:$0xff]
    %v714 = vld [vmem:[%s705 + $0x40] sm:$0xff]
    %v715 = vld [vmem:[%s705 + $0x48] sm:$0xff]
    %v716 = vld [vmem:[%s705 + $0x50] sm:$0xff]
    %v717 = vld [vmem:[%s705 + $0x58] sm:$0xff]
    %v730 = vunpack.c.l.b16 %v706
    %v731 = vunpack.c.h.b16 %v706
    %v732 = vunpack.c.l.b16 %v707
    %v733 = vunpack.c.h.b16 %v707
    %v734 = vunpack.c.l.b16 %v708
    %v735 = vunpack.c.h.b16 %v708
    %v736 = vunpack.c.l.b16 %v709
    %v737 = vunpack.c.h.b16 %v709
    %v738 = vunpack.c.l.b16 %v710
    %v739 = vunpack.c.h.b16 %v710
    %v740 = vunpack.c.l.b16 %v711
    %v741 = vunpack.c.h.b16 %v711
    %v742 = vunpack.c.l.b16 %v712
    %v743 = vunpack.c.h.b16 %v712
    %v744 = vunpack.c.l.b16 %v713
    %v745 = vunpack.c.h.b16 %v713
    %v746 = vunpack.c.l.b16 %v714
    %v747 = vunpack.c.h.b16 %v714
    %v748 = vunpack.c.l.b16 %v715
    %v749 = vunpack.c.h.b16 %v715
    %v750 = vunpack.c.l.b16 %v716
    %v751 = vunpack.c.h.b16 %v716
    %v752 = vunpack.c.l.b16 %v717
    %v753 = vunpack.c.h.b16 %v717
    %v754 = vpack.c.b16 %v732, %v730
    %v755 = vpack.c.b16 %v733, %v731
    %v756 = vpack.c.b16 %v736, %v734
    %v757 = vpack.c.b16 %v737, %v735
    %v758 = vpack.c.b16 %v740, %v738
    %v759 = vpack.c.b16 %v741, %v739
    %v760 = vpack.c.b16 %v744, %v742
    %v761 = vpack.c.b16 %v745, %v743
    %v762 = vpack.c.b16 %v748, %v746
    %v763 = vpack.c.b16 %v749, %v747
    %v764 = vpack.c.b16 %v752, %v750
    %v765 = vpack.c.b16 %v753, %v751
    %v773 = vsel %vm207, %v755, 0
    %v776 = vsel %vm207, %v757, 0
    %v779 = vsel %vm207, %v759, 0
    %v782 = vsel %vm207, %v761, 0
    %v785 = vsel %vm207, %v763, 0
    %v788 = vsel %vm207, %v765, 0
    %790 = vmatpush.bf16.msra.mxu0 %v187
    %791 = vmatpush.bf16.msra.mxu0 %v185
    %792 = vmatpush.bf16.msra.mxu0 %v183
    %793 = vmatpush.bf16.msra.mxu0 %v181
    %794 = vmatpush.bf16.msra.mxu0 %v179
    %795 = vmatpush.bf16.msra.mxu0 %v177
    %796 = vmatpush.bf16.msra.mxu0 %v175
    %797 = vmatpush.bf16.msra.mxu0 %v173
    %798 = vmatmul.bf16.gmra.mxu0 %v754
    %v799 = vpop.f32.mrf.mxu0
    %v800 = vadd.f32 0.0, %v799
    %v801 = vpop.f32.mrf.mxu0
    %v802 = vadd.f32 0.0, %v801
    %803 = vmatmul.bf16.gmra.mxu0 %v756
    %v804 = vpop.f32.mrf.mxu0
    %v805 = vadd.f32 0.0, %v804
    %v806 = vpop.f32.mrf.mxu0
    %v807 = vadd.f32 0.0, %v806
    %808 = vmatmul.bf16.gmra.mxu0 %v758
    %v809 = vpop.f32.mrf.mxu0
    %v810 = vadd.f32 0.0, %v809
    %v811 = vpop.f32.mrf.mxu0
    %v812 = vadd.f32 0.0, %v811
    %813 = vmatmul.bf16.gmra.mxu0 %v760
    %v814 = vpop.f32.mrf.mxu0
    %v815 = vadd.f32 0.0, %v814
    %v816 = vpop.f32.mrf.mxu0
    %v817 = vadd.f32 0.0, %v816
    %818 = vmatmul.bf16.gmra.mxu0 %v762
    %v819 = vpop.f32.mrf.mxu0
    %v820 = vadd.f32 0.0, %v819
    %v821 = vpop.f32.mrf.mxu0
    %v822 = vadd.f32 0.0, %v821
    %823 = vmatmul.bf16.gmra.mxu0 %v764
    %v824 = vpop.f32.mrf.mxu0
    %v825 = vadd.f32 0.0, %v824
    %v826 = vpop.f32.mrf.mxu0
    %v827 = vadd.f32 0.0, %v826
    %828 = vdwg.mxu0
    %829 = vmatpush.bf16.msra.mxu0 0
    %830 = vmatpush.bf16.msra.mxu0 0
    %831 = vmatpush.bf16.msra.mxu0 0
    %832 = vmatpush.bf16.msra.mxu0 0
    %833 = vmatpush.bf16.msra.mxu0 0
    %834 = vmatpush.bf16.msra.mxu0 0
    %835 = vmatpush.bf16.msra.mxu0 0
    %836 = vmatpush.bf16.msra.mxu0 %v228
    %837 = vmatmul.bf16.gmra.mxu0 %v773
    %v838 = vpop.f32.mrf.mxu0
    %v839 = vadd.f32 %v800, %v838
    %v840 = vpop.f32.mrf.mxu0
    %v841 = vadd.f32 %v802, %v840
    %842 = vmatmul.bf16.gmra.mxu0 %v776
    %v843 = vpop.f32.mrf.mxu0
    %v844 = vadd.f32 %v805, %v843
    %v845 = vpop.f32.mrf.mxu0
    %v846 = vadd.f32 %v807, %v845
    %847 = vmatmul.bf16.gmra.mxu0 %v779
    %v848 = vpop.f32.mrf.mxu0
    %v849 = vadd.f32 %v810, %v848
    %v850 = vpop.f32.mrf.mxu0
    %v851 = vadd.f32 %v812, %v850
    %852 = vmatmul.bf16.gmra.mxu0 %v782
    %v853 = vpop.f32.mrf.mxu0
    %v854 = vadd.f32 %v815, %v853
    %v855 = vpop.f32.mrf.mxu0
    %v856 = vadd.f32 %v817, %v855
    %857 = vmatmul.bf16.gmra.mxu0 %v785
    %v858 = vpop.f32.mrf.mxu0
    %v859 = vadd.f32 %v820, %v858
    %v860 = vpop.f32.mrf.mxu0
    %v861 = vadd.f32 %v822, %v860
    %862 = vmatmul.bf16.gmra.mxu0 %v788
    %v863 = vpop.f32.mrf.mxu0
    %v864 = vadd.f32 %v825, %v863
    %v865 = vpop.f32.mrf.mxu0
    %v866 = vadd.f32 %v827, %v865
    %867 = vdwg.mxu0
    %868 = vmatpush.bf16.msra.mxu0 %v188
    %869 = vmatpush.bf16.msra.mxu0 %v186
    %870 = vmatpush.bf16.msra.mxu0 %v184
    %871 = vmatpush.bf16.msra.mxu0 %v182
    %872 = vmatpush.bf16.msra.mxu0 %v180
    %873 = vmatpush.bf16.msra.mxu0 %v178
    %874 = vmatpush.bf16.msra.mxu0 %v176
    %875 = vmatpush.bf16.msra.mxu0 %v174
    %876 = vmatmul.bf16.gmra.mxu0 %v754
    %v877 = vpop.f32.mrf.mxu0
    %v878 = vadd.f32 0.0, %v877
    %v879 = vpop.f32.mrf.mxu0
    %v880 = vadd.f32 0.0, %v879
    %881 = vmatmul.bf16.gmra.mxu0 %v756
    %v882 = vpop.f32.mrf.mxu0
    %v883 = vadd.f32 0.0, %v882
    %v884 = vpop.f32.mrf.mxu0
    %v885 = vadd.f32 0.0, %v884
    %886 = vmatmul.bf16.gmra.mxu0 %v758
    %v887 = vpop.f32.mrf.mxu0
    %v888 = vadd.f32 0.0, %v887
    %v889 = vpop.f32.mrf.mxu0
    %v890 = vadd.f32 0.0, %v889
    %891 = vmatmul.bf16.gmra.mxu0 %v760
    %v892 = vpop.f32.mrf.mxu0
    %v893 = vadd.f32 0.0, %v892
    %v894 = vpop.f32.mrf.mxu0
    %v895 = vadd.f32 0.0, %v894
    %896 = vmatmul.bf16.gmra.mxu0 %v762
    %v897 = vpop.f32.mrf.mxu0
    %v898 = vadd.f32 0.0, %v897
    %v899 = vpop.f32.mrf.mxu0
    %v900 = vadd.f32 0.0, %v899
    %901 = vmatmul.bf16.gmra.mxu0 %v764
    %v902 = vpop.f32.mrf.mxu0
    %v903 = vadd.f32 0.0, %v902
    %v904 = vpop.f32.mrf.mxu0
    %v905 = vadd.f32 0.0, %v904
    %906 = vdwg.mxu0
    %907 = vmatpush.bf16.msra.mxu0 0
    %908 = vmatpush.bf16.msra.mxu0 0
    %909 = vmatpush.bf16.msra.mxu0 0
    %910 = vmatpush.bf16.msra.mxu0 0
    %911 = vmatpush.bf16.msra.mxu0 0
    %912 = vmatpush.bf16.msra.mxu0 0
    %913 = vmatpush.bf16.msra.mxu0 0
    %914 = vmatpush.bf16.msra.mxu0 %v231
    %915 = vmatmul.bf16.gmra.mxu0 %v773
    %v916 = vpop.f32.mrf.mxu0
    %v917 = vadd.f32 %v878, %v916
    %v918 = vpop.f32.mrf.mxu0
    %v919 = vadd.f32 %v880, %v918
    %920 = vmatmul.bf16.gmra.mxu0 %v776
    %v921 = vpop.f32.mrf.mxu0
    %v922 = vadd.f32 %v883, %v921
    %v923 = vpop.f32.mrf.mxu0
    %v924 = vadd.f32 %v885, %v923
    %925 = vmatmul.bf16.gmra.mxu0 %v779
    %v926 = vpop.f32.mrf.mxu0
    %v927 = vadd.f32 %v888, %v926
    %v928 = vpop.f32.mrf.mxu0
    %v929 = vadd.f32 %v890, %v928
    %930 = vmatmul.bf16.gmra.mxu0 %v782
    %v931 = vpop.f32.mrf.mxu0
    %v932 = vadd.f32 %v893, %v931
    %v933 = vpop.f32.mrf.mxu0
    %v934 = vadd.f32 %v895, %v933
    %935 = vmatmul.bf16.gmra.mxu0 %v785
    %v936 = vpop.f32.mrf.mxu0
    %v937 = vadd.f32 %v898, %v936
    %v938 = vpop.f32.mrf.mxu0
    %v939 = vadd.f32 %v900, %v938
    %940 = vmatmul.bf16.gmra.mxu0 %v788
    %v941 = vpop.f32.mrf.mxu0
    %v942 = vadd.f32 %v903, %v941
    %v943 = vpop.f32.mrf.mxu0
    %v944 = vadd.f32 %v905, %v943
    %945 = vdwg.mxu0
    %v946 = vmax.f32 %v839, %v917
    %v947 = vmax.f32 %v841, %v919
    %v948 = vmax.f32 %v844, %v922
    %v949 = vmax.f32 %v846, %v924
    %v950 = vmax.f32 %v849, %v927
    %v951 = vmax.f32 %v851, %v929
    %v952 = vmax.f32 %v854, %v932
    %v953 = vmax.f32 %v856, %v934
    %v954 = vmax.f32 %v859, %v937
    %v955 = vmax.f32 %v861, %v939
    %v956 = vmax.f32 %v864, %v942
    %v957 = vmax.f32 %v866, %v944
    %s958 = scalar_lea.vmem %s0, 288
    %v959 = vld [vmem:[%s958] sm:$0xff]
    %v960 = vld [vmem:[%s958 + $0x8] sm:$0xff]
    %v961 = vld [vmem:[%s958 + $0x10] sm:$0xff]
    %v962 = vld [vmem:[%s958 + $0x18] sm:$0xff]
    %v963 = vld [vmem:[%s958 + $0x20] sm:$0xff]
    %v964 = vld [vmem:[%s958 + $0x28] sm:$0xff]
    %v965 = vld [vmem:[%s958 + $0x30] sm:$0xff]
    %v966 = vld [vmem:[%s958 + $0x38] sm:$0xff]
    %v967 = vld [vmem:[%s958 + $0x40] sm:$0xff]
    %v968 = vld [vmem:[%s958 + $0x48] sm:$0xff]
    %v969 = vld [vmem:[%s958 + $0x50] sm:$0xff]
    %v970 = vld [vmem:[%s958 + $0x58] sm:$0xff]
    %v983 = vunpack.c.l.b16 %v959
    %v984 = vunpack.c.h.b16 %v959
    %v985 = vunpack.c.l.b16 %v960
    %v986 = vunpack.c.h.b16 %v960
    %v987 = vunpack.c.l.b16 %v961
    %v988 = vunpack.c.h.b16 %v961
    %v989 = vunpack.c.l.b16 %v962
    %v990 = vunpack.c.h.b16 %v962
    %v991 = vunpack.c.l.b16 %v963
    %v992 = vunpack.c.h.b16 %v963
    %v993 = vunpack.c.l.b16 %v964
    %v994 = vunpack.c.h.b16 %v964
    %v995 = vunpack.c.l.b16 %v965
    %v996 = vunpack.c.h.b16 %v965
    %v997 = vunpack.c.l.b16 %v966
    %v998 = vunpack.c.h.b16 %v966
    %v999 = vunpack.c.l.b16 %v967
    %v1000 = vunpack.c.h.b16 %v967
    %v1001 = vunpack.c.l.b16 %v968
    %v1002 = vunpack.c.h.b16 %v968
    %v1003 = vunpack.c.l.b16 %v969
    %v1004 = vunpack.c.h.b16 %v969
    %v1005 = vunpack.c.l.b16 %v970
    %v1006 = vunpack.c.h.b16 %v970
    %v1007 = vpack.c.b16 %v985, %v983
    %v1008 = vpack.c.b16 %v986, %v984
    %v1009 = vpack.c.b16 %v989, %v987
    %v1010 = vpack.c.b16 %v990, %v988
    %v1011 = vpack.c.b16 %v993, %v991
    %v1012 = vpack.c.b16 %v994, %v992
    %v1013 = vpack.c.b16 %v997, %v995
    %v1014 = vpack.c.b16 %v998, %v996
    %v1015 = vpack.c.b16 %v1001, %v999
    %v1016 = vpack.c.b16 %v1002, %v1000
    %v1017 = vpack.c.b16 %v1005, %v1003
    %v1018 = vpack.c.b16 %v1006, %v1004
    %v1026 = vsel %vm207, %v1008, 0
    %v1029 = vsel %vm207, %v1010, 0
    %v1032 = vsel %vm207, %v1012, 0
    %v1035 = vsel %vm207, %v1014, 0
    %v1038 = vsel %vm207, %v1016, 0
    %v1041 = vsel %vm207, %v1018, 0
    %1043 = vmatpush.bf16.msra.mxu0 %v187
    %1044 = vmatpush.bf16.msra.mxu0 %v185
    %1045 = vmatpush.bf16.msra.mxu0 %v183
    %1046 = vmatpush.bf16.msra.mxu0 %v181
    %1047 = vmatpush.bf16.msra.mxu0 %v179
    %1048 = vmatpush.bf16.msra.mxu0 %v177
    %1049 = vmatpush.bf16.msra.mxu0 %v175
    %1050 = vmatpush.bf16.msra.mxu0 %v173
    %1051 = vmatmul.bf16.gmra.mxu0 %v1007
    %v1052 = vpop.f32.mrf.mxu0
    %v1053 = vadd.f32 0.0, %v1052
    %v1054 = vpop.f32.mrf.mxu0
    %v1055 = vadd.f32 0.0, %v1054
    %1056 = vmatmul.bf16.gmra.mxu0 %v1009
    %v1057 = vpop.f32.mrf.mxu0
    %v1058 = vadd.f32 0.0, %v1057
    %v1059 = vpop.f32.mrf.mxu0
    %v1060 = vadd.f32 0.0, %v1059
    %1061 = vmatmul.bf16.gmra.mxu0 %v1011
    %v1062 = vpop.f32.mrf.mxu0
    %v1063 = vadd.f32 0.0, %v1062
    %v1064 = vpop.f32.mrf.mxu0
    %v1065 = vadd.f32 0.0, %v1064
    %1066 = vmatmul.bf16.gmra.mxu0 %v1013
    %v1067 = vpop.f32.mrf.mxu0
    %v1068 = vadd.f32 0.0, %v1067
    %v1069 = vpop.f32.mrf.mxu0
    %v1070 = vadd.f32 0.0, %v1069
    %1071 = vmatmul.bf16.gmra.mxu0 %v1015
    %v1072 = vpop.f32.mrf.mxu0
    %v1073 = vadd.f32 0.0, %v1072
    %v1074 = vpop.f32.mrf.mxu0
    %v1075 = vadd.f32 0.0, %v1074
    %1076 = vmatmul.bf16.gmra.mxu0 %v1017
    %v1077 = vpop.f32.mrf.mxu0
    %v1078 = vadd.f32 0.0, %v1077
    %v1079 = vpop.f32.mrf.mxu0
    %v1080 = vadd.f32 0.0, %v1079
    %1081 = vdwg.mxu0
    %1082 = vmatpush.bf16.msra.mxu0 0
    %1083 = vmatpush.bf16.msra.mxu0 0
    %1084 = vmatpush.bf16.msra.mxu0 0
    %1085 = vmatpush.bf16.msra.mxu0 0
    %1086 = vmatpush.bf16.msra.mxu0 0
    %1087 = vmatpush.bf16.msra.mxu0 0
    %1088 = vmatpush.bf16.msra.mxu0 0
    %1089 = vmatpush.bf16.msra.mxu0 %v228
    %1090 = vmatmul.bf16.gmra.mxu0 %v1026
    %v1091 = vpop.f32.mrf.mxu0
    %v1092 = vadd.f32 %v1053, %v1091
    %v1093 = vpop.f32.mrf.mxu0
    %v1094 = vadd.f32 %v1055, %v1093
    %1095 = vmatmul.bf16.gmra.mxu0 %v1029
    %v1096 = vpop.f32.mrf.mxu0
    %v1097 = vadd.f32 %v1058, %v1096
    %v1098 = vpop.f32.mrf.mxu0
    %v1099 = vadd.f32 %v1060, %v1098
    %1100 = vmatmul.bf16.gmra.mxu0 %v1032
    %v1101 = vpop.f32.mrf.mxu0
    %v1102 = vadd.f32 %v1063, %v1101
    %v1103 = vpop.f32.mrf.mxu0
    %v1104 = vadd.f32 %v1065, %v1103
    %1105 = vmatmul.bf16.gmra.mxu0 %v1035
    %v1106 = vpop.f32.mrf.mxu0
    %v1107 = vadd.f32 %v1068, %v1106
    %v1108 = vpop.f32.mrf.mxu0
    %v1109 = vadd.f32 %v1070, %v1108
    %1110 = vmatmul.bf16.gmra.mxu0 %v1038
    %v1111 = vpop.f32.mrf.mxu0
    %v1112 = vadd.f32 %v1073, %v1111
    %v1113 = vpop.f32.mrf.mxu0
    %v1114 = vadd.f32 %v1075, %v1113
    %1115 = vmatmul.bf16.gmra.mxu0 %v1041
    %v1116 = vpop.f32.mrf.mxu0
    %v1117 = vadd.f32 %v1078, %v1116
    %v1118 = vpop.f32.mrf.mxu0
    %v1119 = vadd.f32 %v1080, %v1118
    %1120 = vdwg.mxu0
    %1121 = vmatpush.bf16.msra.mxu0 %v188
    %1122 = vmatpush.bf16.msra.mxu0 %v186
    %1123 = vmatpush.bf16.msra.mxu0 %v184
    %1124 = vmatpush.bf16.msra.mxu0 %v182
    %1125 = vmatpush.bf16.msra.mxu0 %v180
    %1126 = vmatpush.bf16.msra.mxu0 %v178
    %1127 = vmatpush.bf16.msra.mxu0 %v176
    %1128 = vmatpush.bf16.msra.mxu0 %v174
    %1129 = vmatmul.bf16.gmra.mxu0 %v1007
    %v1130 = vpop.f32.mrf.mxu0
    %v1131 = vadd.f32 0.0, %v1130
    %v1132 = vpop.f32.mrf.mxu0
    %v1133 = vadd.f32 0.0, %v1132
    %1134 = vmatmul.bf16.gmra.mxu0 %v1009
    %v1135 = vpop.f32.mrf.mxu0
    %v1136 = vadd.f32 0.0, %v1135
    %v1137 = vpop.f32.mrf.mxu0
    %v1138 = vadd.f32 0.0, %v1137
    %1139 = vmatmul.bf16.gmra.mxu0 %v1011
    %v1140 = vpop.f32.mrf.mxu0
    %v1141 = vadd.f32 0.0, %v1140
    %v1142 = vpop.f32.mrf.mxu0
    %v1143 = vadd.f32 0.0, %v1142
    %1144 = vmatmul.bf16.gmra.mxu0 %v1013
    %v1145 = vpop.f32.mrf.mxu0
    %v1146 = vadd.f32 0.0, %v1145
    %v1147 = vpop.f32.mrf.mxu0
    %v1148 = vadd.f32 0.0, %v1147
    %1149 = vmatmul.bf16.gmra.mxu0 %v1015
    %v1150 = vpop.f32.mrf.mxu0
    %v1151 = vadd.f32 0.0, %v1150
    %v1152 = vpop.f32.mrf.mxu0
    %v1153 = vadd.f32 0.0, %v1152
    %1154 = vmatmul.bf16.gmra.mxu0 %v1017
    %v1155 = vpop.f32.mrf.mxu0
    %v1156 = vadd.f32 0.0, %v1155
    %v1157 = vpop.f32.mrf.mxu0
    %v1158 = vadd.f32 0.0, %v1157
    %1159 = vdwg.mxu0
    %1160 = vmatpush.bf16.msra.mxu0 0
    %1161 = vmatpush.bf16.msra.mxu0 0
    %1162 = vmatpush.bf16.msra.mxu0 0
    %1163 = vmatpush.bf16.msra.mxu0 0
    %1164 = vmatpush.bf16.msra.mxu0 0
    %1165 = vmatpush.bf16.msra.mxu0 0
    %1166 = vmatpush.bf16.msra.mxu0 0
    %1167 = vmatpush.bf16.msra.mxu0 %v231
    %1168 = vmatmul.bf16.gmra.mxu0 %v1026
    %v1169 = vpop.f32.mrf.mxu0
    %v1170 = vadd.f32 %v1131, %v1169
    %v1171 = vpop.f32.mrf.mxu0
    %v1172 = vadd.f32 %v1133, %v1171
    %1173 = vmatmul.bf16.gmra.mxu0 %v1029
    %v1174 = vpop.f32.mrf.mxu0
    %v1175 = vadd.f32 %v1136, %v1174
    %v1176 = vpop.f32.mrf.mxu0
    %v1177 = vadd.f32 %v1138, %v1176
    %1178 = vmatmul.bf16.gmra.mxu0 %v1032
    %v1179 = vpop.f32.mrf.mxu0
    %v1180 = vadd.f32 %v1141, %v1179
    %v1181 = vpop.f32.mrf.mxu0
    %v1182 = vadd.f32 %v1143, %v1181
    %1183 = vmatmul.bf16.gmra.mxu0 %v1035
    %v1184 = vpop.f32.mrf.mxu0
    %v1185 = vadd.f32 %v1146, %v1184
    %v1186 = vpop.f32.mrf.mxu0
    %v1187 = vadd.f32 %v1148, %v1186
    %1188 = vmatmul.bf16.gmra.mxu0 %v1038
    %v1189 = vpop.f32.mrf.mxu0
    %v1190 = vadd.f32 %v1151, %v1189
    %v1191 = vpop.f32.mrf.mxu0
    %v1192 = vadd.f32 %v1153, %v1191
    %1193 = vmatmul.bf16.gmra.mxu0 %v1041
    %v1194 = vpop.f32.mrf.mxu0
    %v1195 = vadd.f32 %v1156, %v1194
    %v1196 = vpop.f32.mrf.mxu0
    %v1197 = vadd.f32 %v1158, %v1196
    %1198 = vdwg.mxu0
    %v1199 = vmax.f32 %v1092, %v1170
    %v1200 = vmax.f32 %v1094, %v1172
    %v1201 = vmax.f32 %v1097, %v1175
    %v1202 = vmax.f32 %v1099, %v1177
    %v1203 = vmax.f32 %v1102, %v1180
    %v1204 = vmax.f32 %v1104, %v1182
    %v1205 = vmax.f32 %v1107, %v1185
    %v1206 = vmax.f32 %v1109, %v1187
    %v1207 = vmax.f32 %v1112, %v1190
    %v1208 = vmax.f32 %v1114, %v1192
    %v1209 = vmax.f32 %v1117, %v1195
    %v1210 = vmax.f32 %v1119, %v1197
    %v1211 = vmax.f32 %v946, %v1199
    %v1212 = vmax.f32 %v947, %v1200
    %v1213 = vmax.f32 %v948, %v1201
    %v1214 = vmax.f32 %v949, %v1202
    %v1215 = vmax.f32 %v950, %v1203
    %v1216 = vmax.f32 %v951, %v1204
    %v1217 = vmax.f32 %v952, %v1205
    %v1218 = vmax.f32 %v953, %v1206
    %v1219 = vmax.f32 %v954, %v1207
    %v1220 = vmax.f32 %v955, %v1208
    %v1221 = vmax.f32 %v956, %v1209
    %v1222 = vmax.f32 %v957, %v1210
    %v1223 = vadd.f32 %v1211, %v667
    %v1224 = vadd.f32 %v1212, %v667
    %v1225 = vadd.f32 %v1213, %v667
    %v1226 = vadd.f32 %v1214, %v667
    %v1227 = vadd.f32 %v1215, %v667
    %v1228 = vadd.f32 %v1216, %v667
    %v1229 = vadd.f32 %v1217, %v667
    %v1230 = vadd.f32 %v1218, %v667
    %v1231 = vadd.f32 %v1219, %v667
    %v1232 = vadd.f32 %v1220, %v667
    %v1233 = vadd.f32 %v1221, %v667
    %v1234 = vadd.f32 %v1222, %v667
    %v1235 = vmax.f32 %v1223, 0.0
    %v1236 = vmax.f32 %v1224, 0.0
    %v1237 = vmax.f32 %v1225, 0.0
    %v1238 = vmax.f32 %v1226, 0.0
    %v1239 = vmax.f32 %v1227, 0.0
    %v1240 = vmax.f32 %v1228, 0.0
    %v1241 = vmax.f32 %v1229, 0.0
    %v1242 = vmax.f32 %v1230, 0.0
    %v1243 = vmax.f32 %v1231, 0.0
    %v1244 = vmax.f32 %v1232, 0.0
    %v1245 = vmax.f32 %v1233, 0.0
    %v1246 = vmax.f32 %v1234, 0.0
    %v1247 = vpack.c.bf16 %v1235, %v1235
    %v1248 = vpack.c.bf16 %v1236, %v1236
    %v1249 = vpack.c.bf16 %v1237, %v1237
    %v1250 = vpack.c.bf16 %v1238, %v1238
    %v1251 = vpack.c.bf16 %v1239, %v1239
    %v1252 = vpack.c.bf16 %v1240, %v1240
    %v1253 = vpack.c.bf16 %v1241, %v1241
    %v1254 = vpack.c.bf16 %v1242, %v1242
    %v1255 = vpack.c.bf16 %v1243, %v1243
    %v1256 = vpack.c.bf16 %v1244, %v1244
    %v1257 = vpack.c.bf16 %v1245, %v1245
    %v1258 = vpack.c.bf16 %v1246, %v1246
    %v1259 = vld [vmem:[%s3] sm:$0xff]
    %v1260 = vld [vmem:[%s3 + $0x8] sm:$0xff]
    %v1261 = vld [vmem:[%s3 + $0x10] sm:$0xff]
    %v1262 = vld [vmem:[%s3 + $0x18] sm:$0xff]
    %v1263 = vld [vmem:[%s3 + $0x20] sm:$0xff]
    %v1264 = vld [vmem:[%s3 + $0x28] sm:$0xff]
    %v1265 = vld [vmem:[%s3 + $0x30] sm:$0xff]
    %v1266 = vld [vmem:[%s3 + $0x38] sm:$0xff]
    %v1267 = vld [vmem:[%s3 + $0x40] sm:$0xff]
    %v1268 = vld [vmem:[%s3 + $0x48] sm:$0xff]
    %v1269 = vld [vmem:[%s3 + $0x50] sm:$0xff]
    %v1270 = vld [vmem:[%s3 + $0x58] sm:$0xff]
    %v1271 = vld [vmem:[%s3 + $0x60] sm:$0xff]
    %v1272 = vld [vmem:[%s3 + $0x68] sm:$0xff]
    %v1273 = vld [vmem:[%s3 + $0x70] sm:$0xff]
    %v1274 = vld [vmem:[%s3 + $0x78] sm:$0xff]
    %s1275 = scalar_lea.vmem %s3, 128
    %v1276 = vld [vmem:[%s1275] sm:$0xff]
    %v1277 = vld [vmem:[%s1275 + $0x8] sm:$0xff]
    %v1278 = vld [vmem:[%s1275 + $0x10] sm:$0xff]
    %v1279 = vld [vmem:[%s1275 + $0x18] sm:$0xff]
    %v1280 = vld [vmem:[%s1275 + $0x20] sm:$0xff]
    %v1281 = vld [vmem:[%s1275 + $0x28] sm:$0xff]
    %v1282 = vld [vmem:[%s1275 + $0x30] sm:$0xff]
    %v1283 = vld [vmem:[%s1275 + $0x38] sm:$0xff]
    %v1284 = vld [vmem:[%s1275 + $0x40] sm:$0xff]
    %v1285 = vld [vmem:[%s1275 + $0x48] sm:$0xff]
    %v1286 = vld [vmem:[%s1275 + $0x50] sm:$0xff]
    %v1287 = vld [vmem:[%s1275 + $0x58] sm:$0xff]
    %v1288 = vld [vmem:[%s1275 + $0x60] sm:$0xff]
    %v1289 = vld [vmem:[%s1275 + $0x68] sm:$0xff]
    %v1290 = vld [vmem:[%s1275 + $0x70] sm:$0xff]
    %v1291 = vld [vmem:[%s1275 + $0x78] sm:$0xff]
    %v1300 = vunpack.c.l.b16 %v1247
    %v1301 = vunpack.c.l.b16 %v1248
    %v1302 = vunpack.c.l.b16 %v1249
    %v1303 = vunpack.c.l.b16 %v1250
    %v1304 = vunpack.c.l.b16 %v1251
    %v1305 = vunpack.c.l.b16 %v1252
    %v1306 = vunpack.c.l.b16 %v1253
    %v1307 = vunpack.c.l.b16 %v1254
    %v1308 = vpack.c.b16 %v1301, %v1300
    %v1309 = vpack.c.b16 %v1303, %v1302
    %v1310 = vpack.c.b16 %v1305, %v1304
    %v1311 = vpack.c.b16 %v1307, %v1306
    %v1332 = vunpack.c.l.b16 %v1276
    %v1333 = vunpack.c.h.b16 %v1276
    %v1334 = vunpack.c.l.b16 %v1277
    %v1335 = vunpack.c.h.b16 %v1277
    %v1336 = vunpack.c.l.b16 %v1278
    %v1337 = vunpack.c.h.b16 %v1278
    %v1338 = vunpack.c.l.b16 %v1279
    %v1339 = vunpack.c.h.b16 %v1279
    %v1340 = vunpack.c.l.b16 %v1280
    %v1341 = vunpack.c.h.b16 %v1280
    %v1342 = vunpack.c.l.b16 %v1281
    %v1343 = vunpack.c.h.b16 %v1281
    %v1344 = vunpack.c.l.b16 %v1282
    %v1345 = vunpack.c.h.b16 %v1282
    %v1346 = vunpack.c.l.b16 %v1283
    %v1347 = vunpack.c.h.b16 %v1283
    %v1348 = vunpack.c.l.b16 %v1284
    %v1349 = vunpack.c.h.b16 %v1284
    %v1350 = vunpack.c.l.b16 %v1285
    %v1351 = vunpack.c.h.b16 %v1285
    %v1352 = vunpack.c.l.b16 %v1286
    %v1353 = vunpack.c.h.b16 %v1286
    %v1354 = vunpack.c.l.b16 %v1287
    %v1355 = vunpack.c.h.b16 %v1287
    %v1356 = vunpack.c.l.b16 %v1288
    %v1357 = vunpack.c.h.b16 %v1288
    %v1358 = vunpack.c.l.b16 %v1289
    %v1359 = vunpack.c.h.b16 %v1289
    %v1360 = vunpack.c.l.b16 %v1290
    %v1361 = vunpack.c.h.b16 %v1290
    %v1362 = vunpack.c.l.b16 %v1291
    %v1363 = vunpack.c.h.b16 %v1291
    %v1364 = vpack.c.b16 %v1334, %v1332
    %v1365 = vpack.c.b16 %v1335, %v1333
    %v1366 = vpack.c.b16 %v1338, %v1336
    %v1367 = vpack.c.b16 %v1339, %v1337
    %v1368 = vpack.c.b16 %v1342, %v1340
    %v1369 = vpack.c.b16 %v1343, %v1341
    %v1370 = vpack.c.b16 %v1346, %v1344
    %v1371 = vpack.c.b16 %v1347, %v1345
    %v1372 = vpack.c.b16 %v1350, %v1348
    %v1373 = vpack.c.b16 %v1351, %v1349
    %v1374 = vpack.c.b16 %v1354, %v1352
    %v1375 = vpack.c.b16 %v1355, %v1353
    %v1376 = vpack.c.b16 %v1358, %v1356
    %v1377 = vpack.c.b16 %v1359, %v1357
    %v1378 = vpack.c.b16 %v1362, %v1360
    %v1379 = vpack.c.b16 %v1363, %v1361
    %1396 = vmatpush.bf16.msra.mxu0 %v1378
    %1397 = vmatpush.bf16.msra.mxu0 %v1376
    %1398 = vmatpush.bf16.msra.mxu0 %v1374
    %1399 = vmatpush.bf16.msra.mxu0 %v1372
    %1400 = vmatpush.bf16.msra.mxu0 %v1370
    %1401 = vmatpush.bf16.msra.mxu0 %v1368
    %1402 = vmatpush.bf16.msra.mxu0 %v1366
    %1403 = vmatpush.bf16.msra.mxu0 %v1364
    %1404 = vmatmul.bf16.gmra.mxu0 %v1308
    %v1405 = vpop.f32.mrf.mxu0
    %v1406 = vadd.f32 0.0, %v1405
    %v1407 = vpop.f32.mrf.mxu0
    %v1408 = vadd.f32 0.0, %v1407
    %1409 = vmatmul.bf16.gmra.mxu0 %v1309
    %v1410 = vpop.f32.mrf.mxu0
    %v1411 = vadd.f32 0.0, %v1410
    %v1412 = vpop.f32.mrf.mxu0
    %v1413 = vadd.f32 0.0, %v1412
    %1414 = vmatmul.bf16.gmra.mxu0 %v1310
    %v1415 = vpop.f32.mrf.mxu0
    %v1416 = vadd.f32 0.0, %v1415
    %v1417 = vpop.f32.mrf.mxu0
    %v1418 = vadd.f32 0.0, %v1417
    %1419 = vmatmul.bf16.gmra.mxu0 %v1311
    %v1420 = vpop.f32.mrf.mxu0
    %v1421 = vadd.f32 0.0, %v1420
    %v1422 = vpop.f32.mrf.mxu0
    %v1423 = vadd.f32 0.0, %v1422
    %1424 = vdwg.mxu0
    %1425 = vmatpush.bf16.msra.mxu0 %v1379
    %1426 = vmatpush.bf16.msra.mxu0 %v1377
    %1427 = vmatpush.bf16.msra.mxu0 %v1375
    %1428 = vmatpush.bf16.msra.mxu0 %v1373
    %1429 = vmatpush.bf16.msra.mxu0 %v1371
    %1430 = vmatpush.bf16.msra.mxu0 %v1369
    %1431 = vmatpush.bf16.msra.mxu0 %v1367
    %1432 = vmatpush.bf16.msra.mxu0 %v1365
    %1433 = vmatmul.bf16.gmra.mxu0 %v1308
    %v1434 = vpop.f32.mrf.mxu0
    %v1435 = vadd.f32 0.0, %v1434
    %v1436 = vpop.f32.mrf.mxu0
    %v1437 = vadd.f32 0.0, %v1436
    %1438 = vmatmul.bf16.gmra.mxu0 %v1309
    %v1439 = vpop.f32.mrf.mxu0
    %v1440 = vadd.f32 0.0, %v1439
    %v1441 = vpop.f32.mrf.mxu0
    %v1442 = vadd.f32 0.0, %v1441
    %1443 = vmatmul.bf16.gmra.mxu0 %v1310
    %v1444 = vpop.f32.mrf.mxu0
    %v1445 = vadd.f32 0.0, %v1444
    %v1446 = vpop.f32.mrf.mxu0
    %v1447 = vadd.f32 0.0, %v1446
    %1448 = vmatmul.bf16.gmra.mxu0 %v1311
    %v1449 = vpop.f32.mrf.mxu0
    %v1450 = vadd.f32 0.0, %v1449
    %v1451 = vpop.f32.mrf.mxu0
    %v1452 = vadd.f32 0.0, %v1451
    %1453 = vdwg.mxu0
    %v1462 = vunpack.c.l.b16 %v693
    %v1463 = vunpack.c.l.b16 %v694
    %v1464 = vunpack.c.l.b16 %v695
    %v1465 = vunpack.c.l.b16 %v696
    %v1466 = vunpack.c.l.b16 %v697
    %v1467 = vunpack.c.l.b16 %v698
    %v1468 = vunpack.c.l.b16 %v699
    %v1469 = vunpack.c.l.b16 %v700
    %v1470 = vpack.c.b16 %v1463, %v1462
    %v1471 = vpack.c.b16 %v1465, %v1464
    %v1472 = vpack.c.b16 %v1467, %v1466
    %v1473 = vpack.c.b16 %v1469, %v1468
    %v1494 = vunpack.c.l.b16 %v1259
    %v1495 = vunpack.c.h.b16 %v1259
    %v1496 = vunpack.c.l.b16 %v1260
    %v1497 = vunpack.c.h.b16 %v1260
    %v1498 = vunpack.c.l.b16 %v1261
    %v1499 = vunpack.c.h.b16 %v1261
    %v1500 = vunpack.c.l.b16 %v1262
    %v1501 = vunpack.c.h.b16 %v1262
    %v1502 = vunpack.c.l.b16 %v1263
    %v1503 = vunpack.c.h.b16 %v1263
    %v1504 = vunpack.c.l.b16 %v1264
    %v1505 = vunpack.c.h.b16 %v1264
    %v1506 = vunpack.c.l.b16 %v1265
    %v1507 = vunpack.c.h.b16 %v1265
    %v1508 = vunpack.c.l.b16 %v1266
    %v1509 = vunpack.c.h.b16 %v1266
    %v1510 = vunpack.c.l.b16 %v1267
    %v1511 = vunpack.c.h.b16 %v1267
    %v1512 = vunpack.c.l.b16 %v1268
    %v1513 = vunpack.c.h.b16 %v1268
    %v1514 = vunpack.c.l.b16 %v1269
    %v1515 = vunpack.c.h.b16 %v1269
    %v1516 = vunpack.c.l.b16 %v1270
    %v1517 = vunpack.c.h.b16 %v1270
    %v1518 = vunpack.c.l.b16 %v1271
    %v1519 = vunpack.c.h.b16 %v1271
    %v1520 = vunpack.c.l.b16 %v1272
    %v1521 = vunpack.c.h.b16 %v1272
    %v1522 = vunpack.c.l.b16 %v1273
    %v1523 = vunpack.c.h.b16 %v1273
    %v1524 = vunpack.c.l.b16 %v1274
    %v1525 = vunpack.c.h.b16 %v1274
    %v1526 = vpack.c.b16 %v1496, %v1494
    %v1527 = vpack.c.b16 %v1497, %v1495
    %v1528 = vpack.c.b16 %v1500, %v1498
    %v1529 = vpack.c.b16 %v1501, %v1499
    %v1530 = vpack.c.b16 %v1504, %v1502
    %v1531 = vpack.c.b16 %v1505, %v1503
    %v1532 = vpack.c.b16 %v1508, %v1506
    %v1533 = vpack.c.b16 %v1509, %v1507
    %v1534 = vpack.c.b16 %v1512, %v1510
    %v1535 = vpack.c.b16 %v1513, %v1511
    %v1536 = vpack.c.b16 %v1516, %v1514
    %v1537 = vpack.c.b16 %v1517, %v1515
    %v1538 = vpack.c.b16 %v1520, %v1518
    %v1539 = vpack.c.b16 %v1521, %v1519
    %v1540 = vpack.c.b16 %v1524, %v1522
    %v1541 = vpack.c.b16 %v1525, %v1523
    %1558 = vmatpush.bf16.msra.mxu0 %v1540
    %1559 = vmatpush.bf16.msra.mxu0 %v1538
    %1560 = vmatpush.bf16.msra.mxu0 %v1536
    %1561 = vmatpush.bf16.msra.mxu0 %v1534
    %1562 = vmatpush.bf16.msra.mxu0 %v1532
    %1563 = vmatpush.bf16.msra.mxu0 %v1530
    %1564 = vmatpush.bf16.msra.mxu0 %v1528
    %1565 = vmatpush.bf16.msra.mxu0 %v1526
    %1566 = vmatmul.bf16.gmra.mxu0 %v1470
    %v1567 = vpop.f32.mrf.mxu0
    %v1568 = vadd.f32 %v1406, %v1567
    %v1569 = vpop.f32.mrf.mxu0
    %v1570 = vadd.f32 %v1408, %v1569
    %1571 = vmatmul.bf16.gmra.mxu0 %v1471
    %v1572 = vpop.f32.mrf.mxu0
    %v1573 = vadd.f32 %v1411, %v1572
    %v1574 = vpop.f32.mrf.mxu0
    %v1575 = vadd.f32 %v1413, %v1574
    %1576 = vmatmul.bf16.gmra.mxu0 %v1472
    %v1577 = vpop.f32.mrf.mxu0
    %v1578 = vadd.f32 %v1416, %v1577
    %v1579 = vpop.f32.mrf.mxu0
    %v1580 = vadd.f32 %v1418, %v1579
    %1581 = vmatmul.bf16.gmra.mxu0 %v1473
    %v1582 = vpop.f32.mrf.mxu0
    %v1583 = vadd.f32 %v1421, %v1582
    %v1584 = vpop.f32.mrf.mxu0
    %v1585 = vadd.f32 %v1423, %v1584
    %1586 = vdwg.mxu0
    %1587 = vmatpush.bf16.msra.mxu0 %v1541
    %1588 = vmatpush.bf16.msra.mxu0 %v1539
    %1589 = vmatpush.bf16.msra.mxu0 %v1537
    %1590 = vmatpush.bf16.msra.mxu0 %v1535
    %1591 = vmatpush.bf16.msra.mxu0 %v1533
    %1592 = vmatpush.bf16.msra.mxu0 %v1531
    %1593 = vmatpush.bf16.msra.mxu0 %v1529
    %1594 = vmatpush.bf16.msra.mxu0 %v1527
    %1595 = vmatmul.bf16.gmra.mxu0 %v1470
    %v1596 = vpop.f32.mrf.mxu0
    %v1597 = vadd.f32 %v1435, %v1596
    %v1598 = vpop.f32.mrf.mxu0
    %v1599 = vadd.f32 %v1437, %v1598
    %1600 = vmatmul.bf16.gmra.mxu0 %v1471
    %v1601 = vpop.f32.mrf.mxu0
    %v1602 = vadd.f32 %v1440, %v1601
    %v1603 = vpop.f32.mrf.mxu0
    %v1604 = vadd.f32 %v1442, %v1603
    %1605 = vmatmul.bf16.gmra.mxu0 %v1472
    %v1606 = vpop.f32.mrf.mxu0
    %v1607 = vadd.f32 %v1445, %v1606
    %v1608 = vpop.f32.mrf.mxu0
    %v1609 = vadd.f32 %v1447, %v1608
    %1610 = vmatmul.bf16.gmra.mxu0 %v1473
    %v1611 = vpop.f32.mrf.mxu0
    %v1612 = vadd.f32 %v1450, %v1611
    %v1613 = vpop.f32.mrf.mxu0
    %v1614 = vadd.f32 %v1452, %v1613
    %1615 = vdwg.mxu0
    %s1616 = scalar_lea.vmem %s3, 256
    %v1617 = vld [vmem:[%s1616] sm:$0xff]
    %v1618 = vld [vmem:[%s1616 + $0x8] sm:$0xff]
    %v1619 = vld [vmem:[%s1616 + $0x10] sm:$0xff]
    %v1620 = vld [vmem:[%s1616 + $0x18] sm:$0xff]
    %v1621 = vld [vmem:[%s1616 + $0x20] sm:$0xff]
    %v1622 = vld [vmem:[%s1616 + $0x28] sm:$0xff]
    %v1623 = vld [vmem:[%s1616 + $0x30] sm:$0xff]
    %v1624 = vld [vmem:[%s1616 + $0x38] sm:$0xff]
    %v1625 = vld [vmem:[%s1616 + $0x40] sm:$0xff]
    %v1626 = vld [vmem:[%s1616 + $0x48] sm:$0xff]
    %v1627 = vld [vmem:[%s1616 + $0x50] sm:$0xff]
    %v1628 = vld [vmem:[%s1616 + $0x58] sm:$0xff]
    %v1629 = vld [vmem:[%s1616 + $0x60] sm:$0xff]
    %v1630 = vld [vmem:[%s1616 + $0x68] sm:$0xff]
    %v1631 = vld [vmem:[%s1616 + $0x70] sm:$0xff]
    %v1632 = vld [vmem:[%s1616 + $0x78] sm:$0xff]
    %v1635 = vunpack.c.l.b16 %v701
    %v1636 = vunpack.c.l.b16 %v702
    %v1637 = vpack.c.b16 %v1636, %v1635
    %v1655 = vunpack.c.l.b16 %v1617
    %v1656 = vunpack.c.h.b16 %v1617
    %v1657 = vunpack.c.l.b16 %v1618
    %v1658 = vunpack.c.h.b16 %v1618
    %v1659 = vunpack.c.l.b16 %v1619
    %v1660 = vunpack.c.h.b16 %v1619
    %v1661 = vunpack.c.l.b16 %v1620
    %v1662 = vunpack.c.h.b16 %v1620
    %v1663 = vunpack.c.l.b16 %v1621
    %v1664 = vunpack.c.h.b16 %v1621
    %v1665 = vunpack.c.l.b16 %v1622
    %v1666 = vunpack.c.h.b16 %v1622
    %v1667 = vunpack.c.l.b16 %v1623
    %v1668 = vunpack.c.h.b16 %v1623
    %v1669 = vunpack.c.l.b16 %v1624
    %v1670 = vunpack.c.h.b16 %v1624
    %v1671 = vunpack.c.l.b16 %v1625
    %v1672 = vunpack.c.h.b16 %v1625
    %v1673 = vunpack.c.l.b16 %v1626
    %v1674 = vunpack.c.h.b16 %v1626
    %v1675 = vunpack.c.l.b16 %v1627
    %v1676 = vunpack.c.h.b16 %v1627
    %v1677 = vunpack.c.l.b16 %v1628
    %v1678 = vunpack.c.h.b16 %v1628
    %v1679 = vunpack.c.l.b16 %v1629
    %v1680 = vunpack.c.h.b16 %v1629
    %v1681 = vunpack.c.l.b16 %v1630
    %v1682 = vunpack.c.h.b16 %v1630
    %v1683 = vunpack.c.l.b16 %v1631
    %v1684 = vunpack.c.h.b16 %v1631
    %v1685 = vunpack.c.l.b16 %v1632
    %v1686 = vunpack.c.h.b16 %v1632
    %v1687 = vpack.c.b16 %v1657, %v1655
    %v1688 = vpack.c.b16 %v1658, %v1656
    %v1689 = vpack.c.b16 %v1661, %v1659
    %v1690 = vpack.c.b16 %v1662, %v1660
    %v1691 = vpack.c.b16 %v1665, %v1663
    %v1692 = vpack.c.b16 %v1666, %v1664
    %v1693 = vpack.c.b16 %v1669, %v1667
    %v1694 = vpack.c.b16 %v1670, %v1668
    %v1695 = vpack.c.b16 %v1673, %v1671
    %v1696 = vpack.c.b16 %v1674, %v1672
    %v1697 = vpack.c.b16 %v1677, %v1675
    %v1698 = vpack.c.b16 %v1678, %v1676
    %v1699 = vpack.c.b16 %v1681, %v1679
    %v1700 = vpack.c.b16 %v1682, %v1680
    %v1701 = vpack.c.b16 %v1685, %v1683
    %v1702 = vpack.c.b16 %v1686, %v1684
    %1719 = vmatpush.bf16.msra.mxu0 %v1701
    %1720 = vmatpush.bf16.msra.mxu0 %v1699
    %1721 = vmatpush.bf16.msra.mxu0 %v1697
    %1722 = vmatpush.bf16.msra.mxu0 %v1695
    %1723 = vmatpush.bf16.msra.mxu0 %v1693
    %1724 = vmatpush.bf16.msra.mxu0 %v1691
    %1725 = vmatpush.bf16.msra.mxu0 %v1689
    %1726 = vmatpush.bf16.msra.mxu0 %v1687
    %1727 = vmatmul.bf16.gmra.mxu0 %v1471
    %v1728 = vpop.f32.mrf.mxu0
    %v1729 = vadd.f32 0.0, %v1728
    %v1730 = vpop.f32.mrf.mxu0
    %v1731 = vadd.f32 0.0, %v1730
    %1732 = vmatmul.bf16.gmra.mxu0 %v1472
    %v1733 = vpop.f32.mrf.mxu0
    %v1734 = vadd.f32 0.0, %v1733
    %v1735 = vpop.f32.mrf.mxu0
    %v1736 = vadd.f32 0.0, %v1735
    %1737 = vmatmul.bf16.gmra.mxu0 %v1473
    %v1738 = vpop.f32.mrf.mxu0
    %v1739 = vadd.f32 0.0, %v1738
    %v1740 = vpop.f32.mrf.mxu0
    %v1741 = vadd.f32 0.0, %v1740
    %1742 = vmatmul.bf16.gmra.mxu0 %v1637
    %v1743 = vpop.f32.mrf.mxu0
    %v1744 = vadd.f32 0.0, %v1743
    %v1745 = vpop.f32.mrf.mxu0
    %v1746 = vadd.f32 0.0, %v1745
    %1747 = vdwg.mxu0
    %1748 = vmatpush.bf16.msra.mxu0 %v1702
    %1749 = vmatpush.bf16.msra.mxu0 %v1700
    %1750 = vmatpush.bf16.msra.mxu0 %v1698
    %1751 = vmatpush.bf16.msra.mxu0 %v1696
    %1752 = vmatpush.bf16.msra.mxu0 %v1694
    %1753 = vmatpush.bf16.msra.mxu0 %v1692
    %1754 = vmatpush.bf16.msra.mxu0 %v1690
    %1755 = vmatpush.bf16.msra.mxu0 %v1688
    %1756 = vmatmul.bf16.gmra.mxu0 %v1471
    %v1757 = vpop.f32.mrf.mxu0
    %v1758 = vadd.f32 0.0, %v1757
    %v1759 = vpop.f32.mrf.mxu0
    %v1760 = vadd.f32 0.0, %v1759
    %1761 = vmatmul.bf16.gmra.mxu0 %v1472
    %v1762 = vpop.f32.mrf.mxu0
    %v1763 = vadd.f32 0.0, %v1762
    %v1764 = vpop.f32.mrf.mxu0
    %v1765 = vadd.f32 0.0, %v1764
    %1766 = vmatmul.bf16.gmra.mxu0 %v1473
    %v1767 = vpop.f32.mrf.mxu0
    %v1768 = vadd.f32 0.0, %v1767
    %v1769 = vpop.f32.mrf.mxu0
    %v1770 = vadd.f32 0.0, %v1769
    %1771 = vmatmul.bf16.gmra.mxu0 %v1637
    %v1772 = vpop.f32.mrf.mxu0
    %v1773 = vadd.f32 0.0, %v1772
    %v1774 = vpop.f32.mrf.mxu0
    %v1775 = vadd.f32 0.0, %v1774
    %1776 = vdwg.mxu0
    %v1777 = vadd.f32 %v1568, %v1729
    %v1778 = vadd.f32 %v1597, %v1758
    %v1779 = vadd.f32 %v1570, %v1731
    %v1780 = vadd.f32 %v1599, %v1760
    %v1781 = vadd.f32 %v1573, %v1734
    %v1782 = vadd.f32 %v1602, %v1763
    %v1783 = vadd.f32 %v1575, %v1736
    %v1784 = vadd.f32 %v1604, %v1765
    %v1785 = vadd.f32 %v1578, %v1739
    %v1786 = vadd.f32 %v1607, %v1768
    %v1787 = vadd.f32 %v1580, %v1741
    %v1788 = vadd.f32 %v1609, %v1770
    %v1789 = vadd.f32 %v1583, %v1744
    %v1790 = vadd.f32 %v1612, %v1773
    %v1791 = vadd.f32 %v1585, %v1746
    %v1792 = vadd.f32 %v1614, %v1775
    %s1793 = scalar_lea.vmem %s3, 384
    %v1794 = vld [vmem:[%s1793] sm:$0xff]
    %v1795 = vld [vmem:[%s1793 + $0x8] sm:$0xff]
    %v1796 = vld [vmem:[%s1793 + $0x10] sm:$0xff]
    %v1797 = vld [vmem:[%s1793 + $0x18] sm:$0xff]
    %v1798 = vld [vmem:[%s1793 + $0x20] sm:$0xff]
    %v1799 = vld [vmem:[%s1793 + $0x28] sm:$0xff]
    %v1800 = vld [vmem:[%s1793 + $0x30] sm:$0xff]
    %v1801 = vld [vmem:[%s1793 + $0x38] sm:$0xff]
    %v1802 = vld [vmem:[%s1793 + $0x40] sm:$0xff]
    %v1803 = vld [vmem:[%s1793 + $0x48] sm:$0xff]
    %v1804 = vld [vmem:[%s1793 + $0x50] sm:$0xff]
    %v1805 = vld [vmem:[%s1793 + $0x58] sm:$0xff]
    %v1806 = vld [vmem:[%s1793 + $0x60] sm:$0xff]
    %v1807 = vld [vmem:[%s1793 + $0x68] sm:$0xff]
    %v1808 = vld [vmem:[%s1793 + $0x70] sm:$0xff]
    %v1809 = vld [vmem:[%s1793 + $0x78] sm:$0xff]
    %v1812 = vunpack.c.l.b16 %v1255
    %v1813 = vunpack.c.l.b16 %v1256
    %v1814 = vpack.c.b16 %v1813, %v1812
    %v1832 = vunpack.c.l.b16 %v1794
    %v1833 = vunpack.c.h.b16 %v1794
    %v1834 = vunpack.c.l.b16 %v1795
    %v1835 = vunpack.c.h.b16 %v1795
    %v1836 = vunpack.c.l.b16 %v1796
    %v1837 = vunpack.c.h.b16 %v1796
    %v1838 = vunpack.c.l.b16 %v1797
    %v1839 = vunpack.c.h.b16 %v1797
    %v1840 = vunpack.c.l.b16 %v1798
    %v1841 = vunpack.c.h.b16 %v1798
    %v1842 = vunpack.c.l.b16 %v1799
    %v1843 = vunpack.c.h.b16 %v1799
    %v1844 = vunpack.c.l.b16 %v1800
    %v1845 = vunpack.c.h.b16 %v1800
    %v1846 = vunpack.c.l.b16 %v1801
    %v1847 = vunpack.c.h.b16 %v1801
    %v1848 = vunpack.c.l.b16 %v1802
    %v1849 = vunpack.c.h.b16 %v1802
    %v1850 = vunpack.c.l.b16 %v1803
    %v1851 = vunpack.c.h.b16 %v1803
    %v1852 = vunpack.c.l.b16 %v1804
    %v1853 = vunpack.c.h.b16 %v1804
    %v1854 = vunpack.c.l.b16 %v1805
    %v1855 = vunpack.c.h.b16 %v1805
    %v1856 = vunpack.c.l.b16 %v1806
    %v1857 = vunpack.c.h.b16 %v1806
    %v1858 = vunpack.c.l.b16 %v1807
    %v1859 = vunpack.c.h.b16 %v1807
    %v1860 = vunpack.c.l.b16 %v1808
    %v1861 = vunpack.c.h.b16 %v1808
    %v1862 = vunpack.c.l.b16 %v1809
    %v1863 = vunpack.c.h.b16 %v1809
    %v1864 = vpack.c.b16 %v1834, %v1832
    %v1865 = vpack.c.b16 %v1835, %v1833
    %v1866 = vpack.c.b16 %v1838, %v1836
    %v1867 = vpack.c.b16 %v1839, %v1837
    %v1868 = vpack.c.b16 %v1842, %v1840
    %v1869 = vpack.c.b16 %v1843, %v1841
    %v1870 = vpack.c.b16 %v1846, %v1844
    %v1871 = vpack.c.b16 %v1847, %v1845
    %v1872 = vpack.c.b16 %v1850, %v1848
    %v1873 = vpack.c.b16 %v1851, %v1849
    %v1874 = vpack.c.b16 %v1854, %v1852
    %v1875 = vpack.c.b16 %v1855, %v1853
    %v1876 = vpack.c.b16 %v1858, %v1856
    %v1877 = vpack.c.b16 %v1859, %v1857
    %v1878 = vpack.c.b16 %v1862, %v1860
    %v1879 = vpack.c.b16 %v1863, %v1861
    %1896 = vmatpush.bf16.msra.mxu0 %v1878
    %1897 = vmatpush.bf16.msra.mxu0 %v1876
    %1898 = vmatpush.bf16.msra.mxu0 %v1874
    %1899 = vmatpush.bf16.msra.mxu0 %v1872
    %1900 = vmatpush.bf16.msra.mxu0 %v1870
    %1901 = vmatpush.bf16.msra.mxu0 %v1868
    %1902 = vmatpush.bf16.msra.mxu0 %v1866
    %1903 = vmatpush.bf16.msra.mxu0 %v1864
    %1904 = vmatmul.bf16.gmra.mxu0 %v1309
    %v1905 = vpop.f32.mrf.mxu0
    %v1906 = vadd.f32 0.0, %v1905
    %v1907 = vpop.f32.mrf.mxu0
    %v1908 = vadd.f32 0.0, %v1907
    %1909 = vmatmul.bf16.gmra.mxu0 %v1310
    %v1910 = vpop.f32.mrf.mxu0
    %v1911 = vadd.f32 0.0, %v1910
    %v1912 = vpop.f32.mrf.mxu0
    %v1913 = vadd.f32 0.0, %v1912
    %1914 = vmatmul.bf16.gmra.mxu0 %v1311
    %v1915 = vpop.f32.mrf.mxu0
    %v1916 = vadd.f32 0.0, %v1915
    %v1917 = vpop.f32.mrf.mxu0
    %v1918 = vadd.f32 0.0, %v1917
    %1919 = vmatmul.bf16.gmra.mxu0 %v1814
    %v1920 = vpop.f32.mrf.mxu0
    %v1921 = vadd.f32 0.0, %v1920
    %v1922 = vpop.f32.mrf.mxu0
    %v1923 = vadd.f32 0.0, %v1922
    %1924 = vdwg.mxu0
    %1925 = vmatpush.bf16.msra.mxu0 %v1879
    %1926 = vmatpush.bf16.msra.mxu0 %v1877
    %1927 = vmatpush.bf16.msra.mxu0 %v1875
    %1928 = vmatpush.bf16.msra.mxu0 %v1873
    %1929 = vmatpush.bf16.msra.mxu0 %v1871
    %1930 = vmatpush.bf16.msra.mxu0 %v1869
    %1931 = vmatpush.bf16.msra.mxu0 %v1867
    %1932 = vmatpush.bf16.msra.mxu0 %v1865
    %1933 = vmatmul.bf16.gmra.mxu0 %v1309
    %v1934 = vpop.f32.mrf.mxu0
    %v1935 = vadd.f32 0.0, %v1934
    %v1936 = vpop.f32.mrf.mxu0
    %v1937 = vadd.f32 0.0, %v1936
    %1938 = vmatmul.bf16.gmra.mxu0 %v1310
    %v1939 = vpop.f32.mrf.mxu0
    %v1940 = vadd.f32 0.0, %v1939
    %v1941 = vpop.f32.mrf.mxu0
    %v1942 = vadd.f32 0.0, %v1941
    %1943 = vmatmul.bf16.gmra.mxu0 %v1311
    %v1944 = vpop.f32.mrf.mxu0
    %v1945 = vadd.f32 0.0, %v1944
    %v1946 = vpop.f32.mrf.mxu0
    %v1947 = vadd.f32 0.0, %v1946
    %1948 = vmatmul.bf16.gmra.mxu0 %v1814
    %v1949 = vpop.f32.mrf.mxu0
    %v1950 = vadd.f32 0.0, %v1949
    %v1951 = vpop.f32.mrf.mxu0
    %v1952 = vadd.f32 0.0, %v1951
    %1953 = vdwg.mxu0
    %v1954 = vadd.f32 %v1777, %v1906
    %v1955 = vadd.f32 %v1778, %v1935
    %v1956 = vadd.f32 %v1779, %v1908
    %v1957 = vadd.f32 %v1780, %v1937
    %v1958 = vadd.f32 %v1781, %v1911
    %v1959 = vadd.f32 %v1782, %v1940
    %v1960 = vadd.f32 %v1783, %v1913
    %v1961 = vadd.f32 %v1784, %v1942
    %v1962 = vadd.f32 %v1785, %v1916
    %v1963 = vadd.f32 %v1786, %v1945
    %v1964 = vadd.f32 %v1787, %v1918
    %v1965 = vadd.f32 %v1788, %v1947
    %v1966 = vadd.f32 %v1789, %v1921
    %v1967 = vadd.f32 %v1790, %v1950
    %v1968 = vadd.f32 %v1791, %v1923
    %v1969 = vadd.f32 %v1792, %v1952
    %s1970 = scalar_lea.vmem %s3, 512
    %v1971 = vld [vmem:[%s1970] sm:$0xff]
    %v1972 = vld [vmem:[%s1970 + $0x8] sm:$0xff]
    %v1973 = vld [vmem:[%s1970 + $0x10] sm:$0xff]
    %v1974 = vld [vmem:[%s1970 + $0x18] sm:$0xff]
    %v1975 = vld [vmem:[%s1970 + $0x20] sm:$0xff]
    %v1976 = vld [vmem:[%s1970 + $0x28] sm:$0xff]
    %v1977 = vld [vmem:[%s1970 + $0x30] sm:$0xff]
    %v1978 = vld [vmem:[%s1970 + $0x38] sm:$0xff]
    %v1979 = vld [vmem:[%s1970 + $0x40] sm:$0xff]
    %v1980 = vld [vmem:[%s1970 + $0x48] sm:$0xff]
    %v1981 = vld [vmem:[%s1970 + $0x50] sm:$0xff]
    %v1982 = vld [vmem:[%s1970 + $0x58] sm:$0xff]
    %v1983 = vld [vmem:[%s1970 + $0x60] sm:$0xff]
    %v1984 = vld [vmem:[%s1970 + $0x68] sm:$0xff]
    %v1985 = vld [vmem:[%s1970 + $0x70] sm:$0xff]
    %v1986 = vld [vmem:[%s1970 + $0x78] sm:$0xff]
    %v1989 = vunpack.c.l.b16 %v703
    %v1990 = vunpack.c.l.b16 %v704
    %v1991 = vpack.c.b16 %v1990, %v1989
    %v2009 = vunpack.c.l.b16 %v1971
    %v2010 = vunpack.c.h.b16 %v1971
    %v2011 = vunpack.c.l.b16 %v1972
    %v2012 = vunpack.c.h.b16 %v1972
    %v2013 = vunpack.c.l.b16 %v1973
    %v2014 = vunpack.c.h.b16 %v1973
    %v2015 = vunpack.c.l.b16 %v1974
    %v2016 = vunpack.c.h.b16 %v1974
    %v2017 = vunpack.c.l.b16 %v1975
    %v2018 = vunpack.c.h.b16 %v1975
    %v2019 = vunpack.c.l.b16 %v1976
    %v2020 = vunpack.c.h.b16 %v1976
    %v2021 = vunpack.c.l.b16 %v1977
    %v2022 = vunpack.c.h.b16 %v1977
    %v2023 = vunpack.c.l.b16 %v1978
    %v2024 = vunpack.c.h.b16 %v1978
    %v2025 = vunpack.c.l.b16 %v1979
    %v2026 = vunpack.c.h.b16 %v1979
    %v2027 = vunpack.c.l.b16 %v1980
    %v2028 = vunpack.c.h.b16 %v1980
    %v2029 = vunpack.c.l.b16 %v1981
    %v2030 = vunpack.c.h.b16 %v1981
    %v2031 = vunpack.c.l.b16 %v1982
    %v2032 = vunpack.c.h.b16 %v1982
    %v2033 = vunpack.c.l.b16 %v1983
    %v2034 = vunpack.c.h.b16 %v1983
    %v2035 = vunpack.c.l.b16 %v1984
    %v2036 = vunpack.c.h.b16 %v1984
    %v2037 = vunpack.c.l.b16 %v1985
    %v2038 = vunpack.c.h.b16 %v1985
    %v2039 = vunpack.c.l.b16 %v1986
    %v2040 = vunpack.c.h.b16 %v1986
    %v2041 = vpack.c.b16 %v2011, %v2009
    %v2042 = vpack.c.b16 %v2012, %v2010
    %v2043 = vpack.c.b16 %v2015, %v2013
    %v2044 = vpack.c.b16 %v2016, %v2014
    %v2045 = vpack.c.b16 %v2019, %v2017
    %v2046 = vpack.c.b16 %v2020, %v2018
    %v2047 = vpack.c.b16 %v2023, %v2021
    %v2048 = vpack.c.b16 %v2024, %v2022
    %v2049 = vpack.c.b16 %v2027, %v2025
    %v2050 = vpack.c.b16 %v2028, %v2026
    %v2051 = vpack.c.b16 %v2031, %v2029
    %v2052 = vpack.c.b16 %v2032, %v2030
    %v2053 = vpack.c.b16 %v2035, %v2033
    %v2054 = vpack.c.b16 %v2036, %v2034
    %v2055 = vpack.c.b16 %v2039, %v2037
    %v2056 = vpack.c.b16 %v2040, %v2038
    %2073 = vmatpush.bf16.msra.mxu0 %v2055
    %2074 = vmatpush.bf16.msra.mxu0 %v2053
    %2075 = vmatpush.bf16.msra.mxu0 %v2051
    %2076 = vmatpush.bf16.msra.mxu0 %v2049
    %2077 = vmatpush.bf16.msra.mxu0 %v2047
    %2078 = vmatpush.bf16.msra.mxu0 %v2045
    %2079 = vmatpush.bf16.msra.mxu0 %v2043
    %2080 = vmatpush.bf16.msra.mxu0 %v2041
    %2081 = vmatmul.bf16.gmra.mxu0 %v1472
    %v2082 = vpop.f32.mrf.mxu0
    %v2083 = vadd.f32 0.0, %v2082
    %v2084 = vpop.f32.mrf.mxu0
    %v2085 = vadd.f32 0.0, %v2084
    %2086 = vmatmul.bf16.gmra.mxu0 %v1473
    %v2087 = vpop.f32.mrf.mxu0
    %v2088 = vadd.f32 0.0, %v2087
    %v2089 = vpop.f32.mrf.mxu0
    %v2090 = vadd.f32 0.0, %v2089
    %2091 = vmatmul.bf16.gmra.mxu0 %v1637
    %v2092 = vpop.f32.mrf.mxu0
    %v2093 = vadd.f32 0.0, %v2092
    %v2094 = vpop.f32.mrf.mxu0
    %v2095 = vadd.f32 0.0, %v2094
    %2096 = vmatmul.bf16.gmra.mxu0 %v1991
    %v2097 = vpop.f32.mrf.mxu0
    %v2098 = vadd.f32 0.0, %v2097
    %v2099 = vpop.f32.mrf.mxu0
    %v2100 = vadd.f32 0.0, %v2099
    %2101 = vdwg.mxu0
    %2102 = vmatpush.bf16.msra.mxu0 %v2056
    %2103 = vmatpush.bf16.msra.mxu0 %v2054
    %2104 = vmatpush.bf16.msra.mxu0 %v2052
    %2105 = vmatpush.bf16.msra.mxu0 %v2050
    %2106 = vmatpush.bf16.msra.mxu0 %v2048
    %2107 = vmatpush.bf16.msra.mxu0 %v2046
    %2108 = vmatpush.bf16.msra.mxu0 %v2044
    %2109 = vmatpush.bf16.msra.mxu0 %v2042
    %2110 = vmatmul.bf16.gmra.mxu0 %v1472
    %v2111 = vpop.f32.mrf.mxu0
    %v2112 = vadd.f32 0.0, %v2111
    %v2113 = vpop.f32.mrf.mxu0
    %v2114 = vadd.f32 0.0, %v2113
    %2115 = vmatmul.bf16.gmra.mxu0 %v1473
    %v2116 = vpop.f32.mrf.mxu0
    %v2117 = vadd.f32 0.0, %v2116
    %v2118 = vpop.f32.mrf.mxu0
    %v2119 = vadd.f32 0.0, %v2118
    %2120 = vmatmul.bf16.gmra.mxu0 %v1637
    %v2121 = vpop.f32.mrf.mxu0
    %v2122 = vadd.f32 0.0, %v2121
    %v2123 = vpop.f32.mrf.mxu0
    %v2124 = vadd.f32 0.0, %v2123
    %2125 = vmatmul.bf16.gmra.mxu0 %v1991
    %v2126 = vpop.f32.mrf.mxu0
    %v2127 = vadd.f32 0.0, %v2126
    %v2128 = vpop.f32.mrf.mxu0
    %v2129 = vadd.f32 0.0, %v2128
    %2130 = vdwg.mxu0
    %v2131 = vadd.f32 %v1954, %v2083
    %v2132 = vadd.f32 %v1955, %v2112
    %v2133 = vadd.f32 %v1956, %v2085
    %v2134 = vadd.f32 %v1957, %v2114
    %v2135 = vadd.f32 %v1958, %v2088
    %v2136 = vadd.f32 %v1959, %v2117
    %v2137 = vadd.f32 %v1960, %v2090
    %v2138 = vadd.f32 %v1961, %v2119
    %v2139 = vadd.f32 %v1962, %v2093
    %v2140 = vadd.f32 %v1963, %v2122
    %v2141 = vadd.f32 %v1964, %v2095
    %v2142 = vadd.f32 %v1965, %v2124
    %v2143 = vadd.f32 %v1966, %v2098
    %v2144 = vadd.f32 %v1967, %v2127
    %v2145 = vadd.f32 %v1968, %v2100
    %v2146 = vadd.f32 %v1969, %v2129
    %v2147 = vmax.f32 %v2131, %v2132
    %v2148 = vmax.f32 %v2133, %v2134
    %v2149 = vmax.f32 %v2135, %v2136
    %v2150 = vmax.f32 %v2137, %v2138
    %v2151 = vmax.f32 %v2139, %v2140
    %v2152 = vmax.f32 %v2141, %v2142
    %v2153 = vmax.f32 %v2143, %v2144
    %v2154 = vmax.f32 %v2145, %v2146
    %2155 = vmatpush.bf16.msra.mxu0 %v1378
    %2156 = vmatpush.bf16.msra.mxu0 %v1376
    %2157 = vmatpush.bf16.msra.mxu0 %v1374
    %2158 = vmatpush.bf16.msra.mxu0 %v1372
    %2159 = vmatpush.bf16.msra.mxu0 %v1370
    %2160 = vmatpush.bf16.msra.mxu0 %v1368
    %2161 = vmatpush.bf16.msra.mxu0 %v1366
    %2162 = vmatpush.bf16.msra.mxu0 %v1364
    %2163 = vmatmul.bf16.gmra.mxu0 %v1471
    %v2164 = vpop.f32.mrf.mxu0
    %v2165 = vadd.f32 0.0, %v2164
    %v2166 = vpop.f32.mrf.mxu0
    %v2167 = vadd.f32 0.0, %v2166
    %2168 = vmatmul.bf16.gmra.mxu0 %v1472
    %v2169 = vpop.f32.mrf.mxu0
    %v2170 = vadd.f32 0.0, %v2169
    %v2171 = vpop.f32.mrf.mxu0
    %v2172 = vadd.f32 0.0, %v2171
    %2173 = vmatmul.bf16.gmra.mxu0 %v1473
    %v2174 = vpop.f32.mrf.mxu0
    %v2175 = vadd.f32 0.0, %v2174
    %v2176 = vpop.f32.mrf.mxu0
    %v2177 = vadd.f32 0.0, %v2176
    %2178 = vmatmul.bf16.gmra.mxu0 %v1637
    %v2179 = vpop.f32.mrf.mxu0
    %v2180 = vadd.f32 0.0, %v2179
    %v2181 = vpop.f32.mrf.mxu0
    %v2182 = vadd.f32 0.0, %v2181
    %2183 = vdwg.mxu0
    %2184 = vmatpush.bf16.msra.mxu0 %v1379
    %2185 = vmatpush.bf16.msra.mxu0 %v1377
    %2186 = vmatpush.bf16.msra.mxu0 %v1375
    %2187 = vmatpush.bf16.msra.mxu0 %v1373
    %2188 = vmatpush.bf16.msra.mxu0 %v1371
    %2189 = vmatpush.bf16.msra.mxu0 %v1369
    %2190 = vmatpush.bf16.msra.mxu0 %v1367
    %2191 = vmatpush.bf16.msra.mxu0 %v1365
    %2192 = vmatmul.bf16.gmra.mxu0 %v1471
    %v2193 = vpop.f32.mrf.mxu0
    %v2194 = vadd.f32 0.0, %v2193
    %v2195 = vpop.f32.mrf.mxu0
    %v2196 = vadd.f32 0.0, %v2195
    %2197 = vmatmul.bf16.gmra.mxu0 %v1472
    %v2198 = vpop.f32.mrf.mxu0
    %v2199 = vadd.f32 0.0, %v2198
    %v2200 = vpop.f32.mrf.mxu0
    %v2201 = vadd.f32 0.0, %v2200
    %2202 = vmatmul.bf16.gmra.mxu0 %v1473
    %v2203 = vpop.f32.mrf.mxu0
    %v2204 = vadd.f32 0.0, %v2203
    %v2205 = vpop.f32.mrf.mxu0
    %v2206 = vadd.f32 0.0, %v2205
    %2207 = vmatmul.bf16.gmra.mxu0 %v1637
    %v2208 = vpop.f32.mrf.mxu0
    %v2209 = vadd.f32 0.0, %v2208
    %v2210 = vpop.f32.mrf.mxu0
    %v2211 = vadd.f32 0.0, %v2210
    %2212 = vdwg.mxu0
    %2213 = vmatpush.bf16.msra.mxu0 %v1540
    %2214 = vmatpush.bf16.msra.mxu0 %v1538
    %2215 = vmatpush.bf16.msra.mxu0 %v1536
    %2216 = vmatpush.bf16.msra.mxu0 %v1534
    %2217 = vmatpush.bf16.msra.mxu0 %v1532
    %2218 = vmatpush.bf16.msra.mxu0 %v1530
    %2219 = vmatpush.bf16.msra.mxu0 %v1528
    %2220 = vmatpush.bf16.msra.mxu0 %v1526
    %2221 = vmatmul.bf16.gmra.mxu0 %v1308
    %v2222 = vpop.f32.mrf.mxu0
    %v2223 = vadd.f32 %v2165, %v2222
    %v2224 = vpop.f32.mrf.mxu0
    %v2225 = vadd.f32 %v2167, %v2224
    %2226 = vmatmul.bf16.gmra.mxu0 %v1309
    %v2227 = vpop.f32.mrf.mxu0
    %v2228 = vadd.f32 %v2170, %v2227
    %v2229 = vpop.f32.mrf.mxu0
    %v2230 = vadd.f32 %v2172, %v2229
    %2231 = vmatmul.bf16.gmra.mxu0 %v1310
    %v2232 = vpop.f32.mrf.mxu0
    %v2233 = vadd.f32 %v2175, %v2232
    %v2234 = vpop.f32.mrf.mxu0
    %v2235 = vadd.f32 %v2177, %v2234
    %2236 = vmatmul.bf16.gmra.mxu0 %v1311
    %v2237 = vpop.f32.mrf.mxu0
    %v2238 = vadd.f32 %v2180, %v2237
    %v2239 = vpop.f32.mrf.mxu0
    %v2240 = vadd.f32 %v2182, %v2239
    %2241 = vdwg.mxu0
    %2242 = vmatpush.bf16.msra.mxu0 %v1541
    %2243 = vmatpush.bf16.msra.mxu0 %v1539
    %2244 = vmatpush.bf16.msra.mxu0 %v1537
    %2245 = vmatpush.bf16.msra.mxu0 %v1535
    %2246 = vmatpush.bf16.msra.mxu0 %v1533
    %2247 = vmatpush.bf16.msra.mxu0 %v1531
    %2248 = vmatpush.bf16.msra.mxu0 %v1529
    %2249 = vmatpush.bf16.msra.mxu0 %v1527
    %2250 = vmatmul.bf16.gmra.mxu0 %v1308
    %v2251 = vpop.f32.mrf.mxu0
    %v2252 = vadd.f32 %v2194, %v2251
    %v2253 = vpop.f32.mrf.mxu0
    %v2254 = vadd.f32 %v2196, %v2253
    %2255 = vmatmul.bf16.gmra.mxu0 %v1309
    %v2256 = vpop.f32.mrf.mxu0
    %v2257 = vadd.f32 %v2199, %v2256
    %v2258 = vpop.f32.mrf.mxu0
    %v2259 = vadd.f32 %v2201, %v2258
    %2260 = vmatmul.bf16.gmra.mxu0 %v1310
    %v2261 = vpop.f32.mrf.mxu0
    %v2262 = vadd.f32 %v2204, %v2261
    %v2263 = vpop.f32.mrf.mxu0
    %v2264 = vadd.f32 %v2206, %v2263
    %2265 = vmatmul.bf16.gmra.mxu0 %v1311
    %v2266 = vpop.f32.mrf.mxu0
    %v2267 = vadd.f32 %v2209, %v2266
    %v2268 = vpop.f32.mrf.mxu0
    %v2269 = vadd.f32 %v2211, %v2268
    %2270 = vdwg.mxu0
    %2271 = vmatpush.bf16.msra.mxu0 %v1701
    %2272 = vmatpush.bf16.msra.mxu0 %v1699
    %2273 = vmatpush.bf16.msra.mxu0 %v1697
    %2274 = vmatpush.bf16.msra.mxu0 %v1695
    %2275 = vmatpush.bf16.msra.mxu0 %v1693
    %2276 = vmatpush.bf16.msra.mxu0 %v1691
    %2277 = vmatpush.bf16.msra.mxu0 %v1689
    %2278 = vmatpush.bf16.msra.mxu0 %v1687
    %2279 = vmatmul.bf16.gmra.mxu0 %v1309
    %v2280 = vpop.f32.mrf.mxu0
    %v2281 = vadd.f32 0.0, %v2280
    %v2282 = vpop.f32.mrf.mxu0
    %v2283 = vadd.f32 0.0, %v2282
    %2284 = vmatmul.bf16.gmra.mxu0 %v1310
    %v2285 = vpop.f32.mrf.mxu0
    %v2286 = vadd.f32 0.0, %v2285
    %v2287 = vpop.f32.mrf.mxu0
    %v2288 = vadd.f32 0.0, %v2287
    %2289 = vmatmul.bf16.gmra.mxu0 %v1311
    %v2290 = vpop.f32.mrf.mxu0
    %v2291 = vadd.f32 0.0, %v2290
    %v2292 = vpop.f32.mrf.mxu0
    %v2293 = vadd.f32 0.0, %v2292
    %2294 = vmatmul.bf16.gmra.mxu0 %v1814
    %v2295 = vpop.f32.mrf.mxu0
    %v2296 = vadd.f32 0.0, %v2295
    %v2297 = vpop.f32.mrf.mxu0
    %v2298 = vadd.f32 0.0, %v2297
    %2299 = vdwg.mxu0
    %2300 = vmatpush.bf16.msra.mxu0 %v1702
    %2301 = vmatpush.bf16.msra.mxu0 %v1700
    %2302 = vmatpush.bf16.msra.mxu0 %v1698
    %2303 = vmatpush.bf16.msra.mxu0 %v1696
    %2304 = vmatpush.bf16.msra.mxu0 %v1694
    %2305 = vmatpush.bf16.msra.mxu0 %v1692
    %2306 = vmatpush.bf16.msra.mxu0 %v1690
    %2307 = vmatpush.bf16.msra.mxu0 %v1688
    %2308 = vmatmul.bf16.gmra.mxu0 %v1309
    %v2309 = vpop.f32.mrf.mxu0
    %v2310 = vadd.f32 0.0, %v2309
    %v2311 = vpop.f32.mrf.mxu0
    %v2312 = vadd.f32 0.0, %v2311
    %2313 = vmatmul.bf16.gmra.mxu0 %v1310
    %v2314 = vpop.f32.mrf.mxu0
    %v2315 = vadd.f32 0.0, %v2314
    %v2316 = vpop.f32.mrf.mxu0
    %v2317 = vadd.f32 0.0, %v2316
    %2318 = vmatmul.bf16.gmra.mxu0 %v1311
    %v2319 = vpop.f32.mrf.mxu0
    %v2320 = vadd.f32 0.0, %v2319
    %v2321 = vpop.f32.mrf.mxu0
    %v2322 = vadd.f32 0.0, %v2321
    %2323 = vmatmul.bf16.gmra.mxu0 %v1814
    %v2324 = vpop.f32.mrf.mxu0
    %v2325 = vadd.f32 0.0, %v2324
    %v2326 = vpop.f32.mrf.mxu0
    %v2327 = vadd.f32 0.0, %v2326
    %2328 = vdwg.mxu0
    %v2329 = vadd.f32 %v2223, %v2281
    %v2330 = vadd.f32 %v2252, %v2310
    %v2331 = vadd.f32 %v2225, %v2283
    %v2332 = vadd.f32 %v2254, %v2312
    %v2333 = vadd.f32 %v2228, %v2286
    %v2334 = vadd.f32 %v2257, %v2315
    %v2335 = vadd.f32 %v2230, %v2288
    %v2336 = vadd.f32 %v2259, %v2317
    %v2337 = vadd.f32 %v2233, %v2291
    %v2338 = vadd.f32 %v2262, %v2320
    %v2339 = vadd.f32 %v2235, %v2293
    %v2340 = vadd.f32 %v2264, %v2322
    %v2341 = vadd.f32 %v2238, %v2296
    %v2342 = vadd.f32 %v2267, %v2325
    %v2343 = vadd.f32 %v2240, %v2298
    %v2344 = vadd.f32 %v2269, %v2327
    %2345 = vmatpush.bf16.msra.mxu0 %v1878
    %2346 = vmatpush.bf16.msra.mxu0 %v1876
    %2347 = vmatpush.bf16.msra.mxu0 %v1874
    %2348 = vmatpush.bf16.msra.mxu0 %v1872
    %2349 = vmatpush.bf16.msra.mxu0 %v1870
    %2350 = vmatpush.bf16.msra.mxu0 %v1868
    %2351 = vmatpush.bf16.msra.mxu0 %v1866
    %2352 = vmatpush.bf16.msra.mxu0 %v1864
    %2353 = vmatmul.bf16.gmra.mxu0 %v1472
    %v2354 = vpop.f32.mrf.mxu0
    %v2355 = vadd.f32 0.0, %v2354
    %v2356 = vpop.f32.mrf.mxu0
    %v2357 = vadd.f32 0.0, %v2356
    %2358 = vmatmul.bf16.gmra.mxu0 %v1473
    %v2359 = vpop.f32.mrf.mxu0
    %v2360 = vadd.f32 0.0, %v2359
    %v2361 = vpop.f32.mrf.mxu0
    %v2362 = vadd.f32 0.0, %v2361
    %2363 = vmatmul.bf16.gmra.mxu0 %v1637
    %v2364 = vpop.f32.mrf.mxu0
    %v2365 = vadd.f32 0.0, %v2364
    %v2366 = vpop.f32.mrf.mxu0
    %v2367 = vadd.f32 0.0, %v2366
    %2368 = vmatmul.bf16.gmra.mxu0 %v1991
    %v2369 = vpop.f32.mrf.mxu0
    %v2370 = vadd.f32 0.0, %v2369
    %v2371 = vpop.f32.mrf.mxu0
    %v2372 = vadd.f32 0.0, %v2371
    %2373 = vdwg.mxu0
    %2374 = vmatpush.bf16.msra.mxu0 %v1879
    %2375 = vmatpush.bf16.msra.mxu0 %v1877
    %2376 = vmatpush.bf16.msra.mxu0 %v1875
    %2377 = vmatpush.bf16.msra.mxu0 %v1873
    %2378 = vmatpush.bf16.msra.mxu0 %v1871
    %2379 = vmatpush.bf16.msra.mxu0 %v1869
    %2380 = vmatpush.bf16.msra.mxu0 %v1867
    %2381 = vmatpush.bf16.msra.mxu0 %v1865
    %2382 = vmatmul.bf16.gmra.mxu0 %v1472
    %v2383 = vpop.f32.mrf.mxu0
    %v2384 = vadd.f32 0.0, %v2383
    %v2385 = vpop.f32.mrf.mxu0
    %v2386 = vadd.f32 0.0, %v2385
    %2387 = vmatmul.bf16.gmra.mxu0 %v1473
    %v2388 = vpop.f32.mrf.mxu0
    %v2389 = vadd.f32 0.0, %v2388
    %v2390 = vpop.f32.mrf.mxu0
    %v2391 = vadd.f32 0.0, %v2390
    %2392 = vmatmul.bf16.gmra.mxu0 %v1637
    %v2393 = vpop.f32.mrf.mxu0
    %v2394 = vadd.f32 0.0, %v2393
    %v2395 = vpop.f32.mrf.mxu0
    %v2396 = vadd.f32 0.0, %v2395
    %2397 = vmatmul.bf16.gmra.mxu0 %v1991
    %v2398 = vpop.f32.mrf.mxu0
    %v2399 = vadd.f32 0.0, %v2398
    %v2400 = vpop.f32.mrf.mxu0
    %v2401 = vadd.f32 0.0, %v2400
    %2402 = vdwg.mxu0
    %v2403 = vadd.f32 %v2329, %v2355
    %v2404 = vadd.f32 %v2330, %v2384
    %v2405 = vadd.f32 %v2331, %v2357
    %v2406 = vadd.f32 %v2332, %v2386
    %v2407 = vadd.f32 %v2333, %v2360
    %v2408 = vadd.f32 %v2334, %v2389
    %v2409 = vadd.f32 %v2335, %v2362
    %v2410 = vadd.f32 %v2336, %v2391
    %v2411 = vadd.f32 %v2337, %v2365
    %v2412 = vadd.f32 %v2338, %v2394
    %v2413 = vadd.f32 %v2339, %v2367
    %v2414 = vadd.f32 %v2340, %v2396
    %v2415 = vadd.f32 %v2341, %v2370
    %v2416 = vadd.f32 %v2342, %v2399
    %v2417 = vadd.f32 %v2343, %v2372
    %v2418 = vadd.f32 %v2344, %v2401
    %v2421 = vunpack.c.l.b16 %v1257
    %v2422 = vunpack.c.l.b16 %v1258
    %v2423 = vpack.c.b16 %v2422, %v2421
    %2425 = vmatpush.bf16.msra.mxu0 %v2055
    %2426 = vmatpush.bf16.msra.mxu0 %v2053
    %2427 = vmatpush.bf16.msra.mxu0 %v2051
    %2428 = vmatpush.bf16.msra.mxu0 %v2049
    %2429 = vmatpush.bf16.msra.mxu0 %v2047
    %2430 = vmatpush.bf16.msra.mxu0 %v2045
    %2431 = vmatpush.bf16.msra.mxu0 %v2043
    %2432 = vmatpush.bf16.msra.mxu0 %v2041
    %2433 = vmatmul.bf16.gmra.mxu0 %v1310
    %v2434 = vpop.f32.mrf.mxu0
    %v2435 = vadd.f32 0.0, %v2434
    %v2436 = vpop.f32.mrf.mxu0
    %v2437 = vadd.f32 0.0, %v2436
    %2438 = vmatmul.bf16.gmra.mxu0 %v1311
    %v2439 = vpop.f32.mrf.mxu0
    %v2440 = vadd.f32 0.0, %v2439
    %v2441 = vpop.f32.mrf.mxu0
    %v2442 = vadd.f32 0.0, %v2441
    %2443 = vmatmul.bf16.gmra.mxu0 %v1814
    %v2444 = vpop.f32.mrf.mxu0
    %v2445 = vadd.f32 0.0, %v2444
    %v2446 = vpop.f32.mrf.mxu0
    %v2447 = vadd.f32 0.0, %v2446
    %2448 = vmatmul.bf16.gmra.mxu0 %v2423
    %v2449 = vpop.f32.mrf.mxu0
    %v2450 = vadd.f32 0.0, %v2449
    %v2451 = vpop.f32.mrf.mxu0
    %v2452 = vadd.f32 0.0, %v2451
    %2453 = vdwg.mxu0
    %2454 = vmatpush.bf16.msra.mxu0 %v2056
    %2455 = vmatpush.bf16.msra.mxu0 %v2054
    %2456 = vmatpush.bf16.msra.mxu0 %v2052
    %2457 = vmatpush.bf16.msra.mxu0 %v2050
    %2458 = vmatpush.bf16.msra.mxu0 %v2048
    %2459 = vmatpush.bf16.msra.mxu0 %v2046
    %2460 = vmatpush.bf16.msra.mxu0 %v2044
    %2461 = vmatpush.bf16.msra.mxu0 %v2042
    %2462 = vmatmul.bf16.gmra.mxu0 %v1310
    %v2463 = vpop.f32.mrf.mxu0
    %v2464 = vadd.f32 0.0, %v2463
    %v2465 = vpop.f32.mrf.mxu0
    %v2466 = vadd.f32 0.0, %v2465
    %2467 = vmatmul.bf16.gmra.mxu0 %v1311
    %v2468 = vpop.f32.mrf.mxu0
    %v2469 = vadd.f32 0.0, %v2468
    %v2470 = vpop.f32.mrf.mxu0
    %v2471 = vadd.f32 0.0, %v2470
    %2472 = vmatmul.bf16.gmra.mxu0 %v1814
    %v2473 = vpop.f32.mrf.mxu0
    %v2474 = vadd.f32 0.0, %v2473
    %v2475 = vpop.f32.mrf.mxu0
    %v2476 = vadd.f32 0.0, %v2475
    %2477 = vmatmul.bf16.gmra.mxu0 %v2423
    %v2478 = vpop.f32.mrf.mxu0
    %v2479 = vadd.f32 0.0, %v2478
    %v2480 = vpop.f32.mrf.mxu0
    %v2481 = vadd.f32 0.0, %v2480
    %2482 = vdwg.mxu0
    %v2483 = vadd.f32 %v2403, %v2435
    %v2484 = vadd.f32 %v2404, %v2464
    %v2485 = vadd.f32 %v2405, %v2437
    %v2486 = vadd.f32 %v2406, %v2466
    %v2487 = vadd.f32 %v2407, %v2440
    %v2488 = vadd.f32 %v2408, %v2469
    %v2489 = vadd.f32 %v2409, %v2442
    %v2490 = vadd.f32 %v2410, %v2471
    %v2491 = vadd.f32 %v2411, %v2445
    %v2492 = vadd.f32 %v2412, %v2474
    %v2493 = vadd.f32 %v2413, %v2447
    %v2494 = vadd.f32 %v2414, %v2476
    %v2495 = vadd.f32 %v2415, %v2450
    %v2496 = vadd.f32 %v2416, %v2479
    %v2497 = vadd.f32 %v2417, %v2452
    %v2498 = vadd.f32 %v2418, %v2481
    %v2499 = vmax.f32 %v2483, %v2484
    %v2500 = vmax.f32 %v2485, %v2486
    %v2501 = vmax.f32 %v2487, %v2488
    %v2502 = vmax.f32 %v2489, %v2490
    %v2503 = vmax.f32 %v2491, %v2492
    %v2504 = vmax.f32 %v2493, %v2494
    %v2505 = vmax.f32 %v2495, %v2496
    %v2506 = vmax.f32 %v2497, %v2498
    %v2507 = vmax.f32 %v2147, %v2499
    %v2508 = vmax.f32 %v2148, %v2500
    %v2509 = vmax.f32 %v2149, %v2501
    %v2510 = vmax.f32 %v2150, %v2502
    %v2511 = vmax.f32 %v2151, %v2503
    %v2512 = vmax.f32 %v2152, %v2504
    %v2513 = vmax.f32 %v2153, %v2505
    %v2514 = vmax.f32 %v2154, %v2506
    %v2515 = vld [vmem:[%s4] sm:$0x1]
    %v2517 = vperm.slane %v2515, 0
    %v2519 = vadd.f32 %v2507, %v2517
    %v2520 = vadd.f32 %v2508, %v2517
    %v2521 = vadd.f32 %v2509, %v2517
    %v2522 = vadd.f32 %v2510, %v2517
    %v2523 = vadd.f32 %v2511, %v2517
    %v2524 = vadd.f32 %v2512, %v2517
    %v2525 = vadd.f32 %v2513, %v2517
    %v2526 = vadd.f32 %v2514, %v2517
    %v2527 = vmax.f32 %v2519, 0.0
    %v2528 = vmax.f32 %v2520, 0.0
    %v2529 = vmax.f32 %v2521, 0.0
    %v2530 = vmax.f32 %v2522, 0.0
    %v2531 = vmax.f32 %v2523, 0.0
    %v2532 = vmax.f32 %v2524, 0.0
    %v2533 = vmax.f32 %v2525, 0.0
    %v2534 = vmax.f32 %v2526, 0.0
    %v2535 = vpack.c.bf16 %v2527, %v2527
    %v2536 = vpack.c.bf16 %v2528, %v2528
    %v2537 = vpack.c.bf16 %v2529, %v2529
    %v2538 = vpack.c.bf16 %v2530, %v2530
    %v2539 = vpack.c.bf16 %v2531, %v2531
    %v2540 = vpack.c.bf16 %v2532, %v2532
    %v2541 = vpack.c.bf16 %v2533, %v2533
    %v2542 = vpack.c.bf16 %v2534, %v2534
    %v2543 = vld [vmem:[%s5] sm:$0xf]
    %v2544 = vld [vmem:[%s5 + $0x4] sm:$0xf]
    %v2545 = vld [vmem:[%s5 + $0x8] sm:$0xf]
    %v2546 = vld [vmem:[%s5 + $0xc] sm:$0xf]
    %v2547 = vld [vmem:[%s5 + $0x10] sm:$0xf]
    %v2548 = vld [vmem:[%s5 + $0x14] sm:$0xf]
    %v2549 = vld [vmem:[%s5 + $0x18] sm:$0xf]
    %v2550 = vld [vmem:[%s5 + $0x1c] sm:$0xf]
    %v2551 = vld [vmem:[%s5 + $0x20] sm:$0xf]
    %v2552 = vld [vmem:[%s5 + $0x24] sm:$0xf]
    %v2553 = vld [vmem:[%s5 + $0x28] sm:$0xf]
    %v2554 = vld [vmem:[%s5 + $0x2c] sm:$0xf]
    %v2555 = vld [vmem:[%s5 + $0x30] sm:$0xf]
    %v2556 = vld [vmem:[%s5 + $0x34] sm:$0xf]
    %v2557 = vld [vmem:[%s5 + $0x38] sm:$0xf]
    %v2558 = vld [vmem:[%s5 + $0x3c] sm:$0xf]
    %s2559 = scalar_lea.vmem %s5, 64
    %v2560 = vld [vmem:[%s2559] sm:$0xf]
    %v2561 = vld [vmem:[%s2559 + $0x4] sm:$0xf]
    %v2562 = vld [vmem:[%s2559 + $0x8] sm:$0xf]
    %v2563 = vld [vmem:[%s2559 + $0xc] sm:$0xf]
    %v2564 = vld [vmem:[%s2559 + $0x10] sm:$0xf]
    %v2565 = vld [vmem:[%s2559 + $0x14] sm:$0xf]
    %v2566 = vld [vmem:[%s2559 + $0x18] sm:$0xf]
    %v2567 = vld [vmem:[%s2559 + $0x1c] sm:$0xf]
    %v2568 = vld [vmem:[%s2559 + $0x20] sm:$0xf]
    %v2569 = vld [vmem:[%s2559 + $0x24] sm:$0xf]
    %v2570 = vld [vmem:[%s2559 + $0x28] sm:$0xf]
    %v2571 = vld [vmem:[%s2559 + $0x2c] sm:$0xf]
    %v2572 = vld [vmem:[%s2559 + $0x30] sm:$0xf]
    %v2573 = vld [vmem:[%s2559 + $0x34] sm:$0xf]
    %v2574 = vld [vmem:[%s2559 + $0x38] sm:$0xf]
    %v2575 = vld [vmem:[%s2559 + $0x3c] sm:$0xf]
    %v2578 = vunpack.c.l.b16 %v2537
    %v2579 = vunpack.c.l.b16 %v2538
    %v2580 = vpack.c.b16 %v2579, %v2578
    %v2598 = vunpack.c.l.b16 %v2560
    %v2599 = vunpack.c.l.b16 %v2561
    %v2600 = vunpack.c.l.b16 %v2562
    %v2601 = vunpack.c.l.b16 %v2563
    %v2602 = vunpack.c.l.b16 %v2564
    %v2603 = vunpack.c.l.b16 %v2565
    %v2604 = vunpack.c.l.b16 %v2566
    %v2605 = vunpack.c.l.b16 %v2567
    %v2606 = vunpack.c.l.b16 %v2568
    %v2607 = vunpack.c.l.b16 %v2569
    %v2608 = vunpack.c.l.b16 %v2570
    %v2609 = vunpack.c.l.b16 %v2571
    %v2610 = vunpack.c.l.b16 %v2572
    %v2611 = vunpack.c.l.b16 %v2573
    %v2612 = vunpack.c.l.b16 %v2574
    %v2613 = vunpack.c.l.b16 %v2575
    %v2614 = vpack.c.b16 %v2599, %v2598
    %v2615 = vpack.c.b16 %v2601, %v2600
    %v2616 = vpack.c.b16 %v2603, %v2602
    %v2617 = vpack.c.b16 %v2605, %v2604
    %v2618 = vpack.c.b16 %v2607, %v2606
    %v2619 = vpack.c.b16 %v2609, %v2608
    %v2620 = vpack.c.b16 %v2611, %v2610
    %v2621 = vpack.c.b16 %v2613, %v2612
    %2630 = vmatpush.bf16.msra.mxu0 %v2621
    %2631 = vmatpush.bf16.msra.mxu0 %v2620
    %2632 = vmatpush.bf16.msra.mxu0 %v2619
    %2633 = vmatpush.bf16.msra.mxu0 %v2618
    %2634 = vmatpush.bf16.msra.mxu0 %v2617
    %2635 = vmatpush.bf16.msra.mxu0 %v2616
    %2636 = vmatpush.bf16.msra.mxu0 %v2615
    %2637 = vmatpush.bf16.msra.mxu0 %v2614
    %2638 = vmatmul.bf16.gmra.mxu0 %v2580
    %v2639 = vpop.f32.mrf.mxu0
    %v2640 = vadd.f32 0.0, %v2639
    %v2641 = vpop.f32.mrf.mxu0
    %v2642 = vadd.f32 0.0, %v2641
    %2643 = vdwg.mxu0
    %v2646 = vunpack.c.l.b16 %v2535
    %v2647 = vunpack.c.l.b16 %v2536
    %v2648 = vpack.c.b16 %v2647, %v2646
    %v2666 = vunpack.c.l.b16 %v2543
    %v2667 = vunpack.c.l.b16 %v2544
    %v2668 = vunpack.c.l.b16 %v2545
    %v2669 = vunpack.c.l.b16 %v2546
    %v2670 = vunpack.c.l.b16 %v2547
    %v2671 = vunpack.c.l.b16 %v2548
    %v2672 = vunpack.c.l.b16 %v2549
    %v2673 = vunpack.c.l.b16 %v2550
    %v2674 = vunpack.c.l.b16 %v2551
    %v2675 = vunpack.c.l.b16 %v2552
    %v2676 = vunpack.c.l.b16 %v2553
    %v2677 = vunpack.c.l.b16 %v2554
    %v2678 = vunpack.c.l.b16 %v2555
    %v2679 = vunpack.c.l.b16 %v2556
    %v2680 = vunpack.c.l.b16 %v2557
    %v2681 = vunpack.c.l.b16 %v2558
    %v2682 = vpack.c.b16 %v2667, %v2666
    %v2683 = vpack.c.b16 %v2669, %v2668
    %v2684 = vpack.c.b16 %v2671, %v2670
    %v2685 = vpack.c.b16 %v2673, %v2672
    %v2686 = vpack.c.b16 %v2675, %v2674
    %v2687 = vpack.c.b16 %v2677, %v2676
    %v2688 = vpack.c.b16 %v2679, %v2678
    %v2689 = vpack.c.b16 %v2681, %v2680
    %2698 = vmatpush.bf16.msra.mxu0 %v2689
    %2699 = vmatpush.bf16.msra.mxu0 %v2688
    %2700 = vmatpush.bf16.msra.mxu0 %v2687
    %2701 = vmatpush.bf16.msra.mxu0 %v2686
    %2702 = vmatpush.bf16.msra.mxu0 %v2685
    %2703 = vmatpush.bf16.msra.mxu0 %v2684
    %2704 = vmatpush.bf16.msra.mxu0 %v2683
    %2705 = vmatpush.bf16.msra.mxu0 %v2682
    %2706 = vmatmul.bf16.gmra.mxu0 %v2648
    %v2707 = vpop.f32.mrf.mxu0
    %v2708 = vadd.f32 %v2640, %v2707
    %v2709 = vpop.f32.mrf.mxu0
    %v2710 = vadd.f32 %v2642, %v2709
    %2711 = vdwg.mxu0
    %s2712 = scalar_lea.vmem %s5, 128
    %v2713 = vld [vmem:[%s2712] sm:$0xf]
    %v2714 = vld [vmem:[%s2712 + $0x4] sm:$0xf]
    %v2715 = vld [vmem:[%s2712 + $0x8] sm:$0xf]
    %v2716 = vld [vmem:[%s2712 + $0xc] sm:$0xf]
    %v2717 = vld [vmem:[%s2712 + $0x10] sm:$0xf]
    %v2718 = vld [vmem:[%s2712 + $0x14] sm:$0xf]
    %v2719 = vld [vmem:[%s2712 + $0x18] sm:$0xf]
    %v2720 = vld [vmem:[%s2712 + $0x1c] sm:$0xf]
    %v2721 = vld [vmem:[%s2712 + $0x20] sm:$0xf]
    %v2722 = vld [vmem:[%s2712 + $0x24] sm:$0xf]
    %v2723 = vld [vmem:[%s2712 + $0x28] sm:$0xf]
    %v2724 = vld [vmem:[%s2712 + $0x2c] sm:$0xf]
    %v2725 = vld [vmem:[%s2712 + $0x30] sm:$0xf]
    %v2726 = vld [vmem:[%s2712 + $0x34] sm:$0xf]
    %v2727 = vld [vmem:[%s2712 + $0x38] sm:$0xf]
    %v2728 = vld [vmem:[%s2712 + $0x3c] sm:$0xf]
    %v2731 = vunpack.c.l.b16 %v2539
    %v2732 = vunpack.c.l.b16 %v2540
    %v2733 = vpack.c.b16 %v2732, %v2731
    %v2751 = vunpack.c.l.b16 %v2713
    %v2752 = vunpack.c.l.b16 %v2714
    %v2753 = vunpack.c.l.b16 %v2715
    %v2754 = vunpack.c.l.b16 %v2716
    %v2755 = vunpack.c.l.b16 %v2717
    %v2756 = vunpack.c.l.b16 %v2718
    %v2757 = vunpack.c.l.b16 %v2719
    %v2758 = vunpack.c.l.b16 %v2720
    %v2759 = vunpack.c.l.b16 %v2721
    %v2760 = vunpack.c.l.b16 %v2722
    %v2761 = vunpack.c.l.b16 %v2723
    %v2762 = vunpack.c.l.b16 %v2724
    %v2763 = vunpack.c.l.b16 %v2725
    %v2764 = vunpack.c.l.b16 %v2726
    %v2765 = vunpack.c.l.b16 %v2727
    %v2766 = vunpack.c.l.b16 %v2728
    %v2767 = vpack.c.b16 %v2752, %v2751
    %v2768 = vpack.c.b16 %v2754, %v2753
    %v2769 = vpack.c.b16 %v2756, %v2755
    %v2770 = vpack.c.b16 %v2758, %v2757
    %v2771 = vpack.c.b16 %v2760, %v2759
    %v2772 = vpack.c.b16 %v2762, %v2761
    %v2773 = vpack.c.b16 %v2764, %v2763
    %v2774 = vpack.c.b16 %v2766, %v2765
    %2783 = vmatpush.bf16.msra.mxu0 %v2774
    %2784 = vmatpush.bf16.msra.mxu0 %v2773
    %2785 = vmatpush.bf16.msra.mxu0 %v2772
    %2786 = vmatpush.bf16.msra.mxu0 %v2771
    %2787 = vmatpush.bf16.msra.mxu0 %v2770
    %2788 = vmatpush.bf16.msra.mxu0 %v2769
    %2789 = vmatpush.bf16.msra.mxu0 %v2768
    %2790 = vmatpush.bf16.msra.mxu0 %v2767
    %2791 = vmatmul.bf16.gmra.mxu0 %v2733
    %v2792 = vpop.f32.mrf.mxu0
    %v2793 = vadd.f32 0.0, %v2792
    %v2794 = vpop.f32.mrf.mxu0
    %v2795 = vadd.f32 0.0, %v2794
    %2796 = vdwg.mxu0
    %v2797 = vadd.f32 %v2708, %v2793
    %v2798 = vadd.f32 %v2710, %v2795
    %s2799 = scalar_lea.vmem %s5, 192
    %v2800 = vld [vmem:[%s2799] sm:$0xf]
    %v2801 = vld [vmem:[%s2799 + $0x4] sm:$0xf]
    %v2802 = vld [vmem:[%s2799 + $0x8] sm:$0xf]
    %v2803 = vld [vmem:[%s2799 + $0xc] sm:$0xf]
    %v2804 = vld [vmem:[%s2799 + $0x10] sm:$0xf]
    %v2805 = vld [vmem:[%s2799 + $0x14] sm:$0xf]
    %v2806 = vld [vmem:[%s2799 + $0x18] sm:$0xf]
    %v2807 = vld [vmem:[%s2799 + $0x1c] sm:$0xf]
    %v2808 = vld [vmem:[%s2799 + $0x20] sm:$0xf]
    %v2809 = vld [vmem:[%s2799 + $0x24] sm:$0xf]
    %v2810 = vld [vmem:[%s2799 + $0x28] sm:$0xf]
    %v2811 = vld [vmem:[%s2799 + $0x2c] sm:$0xf]
    %v2812 = vld [vmem:[%s2799 + $0x30] sm:$0xf]
    %v2813 = vld [vmem:[%s2799 + $0x34] sm:$0xf]
    %v2814 = vld [vmem:[%s2799 + $0x38] sm:$0xf]
    %v2815 = vld [vmem:[%s2799 + $0x3c] sm:$0xf]
    %v2818 = vunpack.c.l.b16 %v2541
    %v2819 = vunpack.c.l.b16 %v2542
    %v2820 = vpack.c.b16 %v2819, %v2818
    %v2838 = vunpack.c.l.b16 %v2800
    %v2839 = vunpack.c.l.b16 %v2801
    %v2840 = vunpack.c.l.b16 %v2802
    %v2841 = vunpack.c.l.b16 %v2803
    %v2842 = vunpack.c.l.b16 %v2804
    %v2843 = vunpack.c.l.b16 %v2805
    %v2844 = vunpack.c.l.b16 %v2806
    %v2845 = vunpack.c.l.b16 %v2807
    %v2846 = vunpack.c.l.b16 %v2808
    %v2847 = vunpack.c.l.b16 %v2809
    %v2848 = vunpack.c.l.b16 %v2810
    %v2849 = vunpack.c.l.b16 %v2811
    %v2850 = vunpack.c.l.b16 %v2812
    %v2851 = vunpack.c.l.b16 %v2813
    %v2852 = vunpack.c.l.b16 %v2814
    %v2853 = vunpack.c.l.b16 %v2815
    %v2854 = vpack.c.b16 %v2839, %v2838
    %v2855 = vpack.c.b16 %v2841, %v2840
    %v2856 = vpack.c.b16 %v2843, %v2842
    %v2857 = vpack.c.b16 %v2845, %v2844
    %v2858 = vpack.c.b16 %v2847, %v2846
    %v2859 = vpack.c.b16 %v2849, %v2848
    %v2860 = vpack.c.b16 %v2851, %v2850
    %v2861 = vpack.c.b16 %v2853, %v2852
    %2870 = vmatpush.bf16.msra.mxu0 %v2861
    %2871 = vmatpush.bf16.msra.mxu0 %v2860
    %2872 = vmatpush.bf16.msra.mxu0 %v2859
    %2873 = vmatpush.bf16.msra.mxu0 %v2858
    %2874 = vmatpush.bf16.msra.mxu0 %v2857
    %2875 = vmatpush.bf16.msra.mxu0 %v2856
    %2876 = vmatpush.bf16.msra.mxu0 %v2855
    %2877 = vmatpush.bf16.msra.mxu0 %v2854
    %2878 = vmatmul.bf16.gmra.mxu0 %v2820
    %v2879 = vpop.f32.mrf.mxu0
    %v2880 = vadd.f32 0.0, %v2879
    %v2881 = vpop.f32.mrf.mxu0
    %v2882 = vadd.f32 0.0, %v2881
    %2883 = vdwg.mxu0
    %v2884 = vadd.f32 %v2797, %v2880
    %v2885 = vadd.f32 %v2798, %v2882
    %v2886 = vld [vmem:[%s6] sm:$0x1]
    %v2888 = vperm.slane %v2886, 0
    %v2890 = vadd.f32 %v2884, %v2888
    %v2891 = vadd.f32 %v2885, %v2888
    %v2892 = vmax.f32 %v2890, 0.0
    %v2893 = vmax.f32 %v2891, 0.0
    %v2894 = vpack.c.bf16 %v2893, %v2892
    %v2895 = vld [vmem:[%s7] sm:$0xf]
    %v2896 = vld [vmem:[%s7 + $0x4] sm:$0xf]
    %v2897 = vld [vmem:[%s7 + $0x8] sm:$0xf]
    %v2898 = vld [vmem:[%s7 + $0xc] sm:$0xf]
    %v2899 = vld [vmem:[%s7 + $0x10] sm:$0xf]
    %v2900 = vld [vmem:[%s7 + $0x14] sm:$0xf]
    %v2901 = vld [vmem:[%s7 + $0x18] sm:$0xf]
    %v2902 = vld [vmem:[%s7 + $0x1c] sm:$0xf]
    %v2903 = vld [vmem:[%s7 + $0x20] sm:$0xf]
    %v2904 = vld [vmem:[%s7 + $0x24] sm:$0xf]
    %v2905 = vld [vmem:[%s7 + $0x28] sm:$0xf]
    %v2906 = vld [vmem:[%s7 + $0x2c] sm:$0xf]
    %v2907 = vld [vmem:[%s7 + $0x30] sm:$0xf]
    %v2908 = vld [vmem:[%s7 + $0x34] sm:$0xf]
    %v2909 = vld [vmem:[%s7 + $0x38] sm:$0xf]
    %v2910 = vld [vmem:[%s7 + $0x3c] sm:$0xf]
    %v2911 = vld [vmem:[%s8] sm:$0x1]
    %v2913 = vperm.slane %v2911, 0
    %v2931 = vunpack.c.l.b16 %v2895
    %v2932 = vunpack.c.l.b16 %v2896
    %v2933 = vunpack.c.l.b16 %v2897
    %v2934 = vunpack.c.l.b16 %v2898
    %v2935 = vunpack.c.l.b16 %v2899
    %v2936 = vunpack.c.l.b16 %v2900
    %v2937 = vunpack.c.l.b16 %v2901
    %v2938 = vunpack.c.l.b16 %v2902
    %v2939 = vunpack.c.l.b16 %v2903
    %v2940 = vunpack.c.l.b16 %v2904
    %v2941 = vunpack.c.l.b16 %v2905
    %v2942 = vunpack.c.l.b16 %v2906
    %v2943 = vunpack.c.l.b16 %v2907
    %v2944 = vunpack.c.l.b16 %v2908
    %v2945 = vunpack.c.l.b16 %v2909
    %v2946 = vunpack.c.l.b16 %v2910
    %v2947 = vpack.c.b16 %v2932, %v2931
    %v2948 = vpack.c.b16 %v2934, %v2933
    %v2949 = vpack.c.b16 %v2936, %v2935
    %v2950 = vpack.c.b16 %v2938, %v2937
    %v2951 = vpack.c.b16 %v2940, %v2939
    %v2952 = vpack.c.b16 %v2942, %v2941
    %v2953 = vpack.c.b16 %v2944, %v2943
    %v2954 = vpack.c.b16 %v2946, %v2945
    %2963 = vmatpush.bf16.msra.mxu0 %v2954
    %2964 = vmatpush.bf16.msra.mxu0 %v2953
    %2965 = vmatpush.bf16.msra.mxu0 %v2952
    %2966 = vmatpush.bf16.msra.mxu0 %v2951
    %2967 = vmatpush.bf16.msra.mxu0 %v2950
    %2968 = vmatpush.bf16.msra.mxu0 %v2949
    %2969 = vmatpush.bf16.msra.mxu0 %v2948
    %2970 = vmatpush.bf16.msra.mxu0 %v2947
    %2971 = vmatmul.bf16.gmra.mxu0 %v2894
    %v2972 = vpop.f32.mrf.mxu0
    %v2973 = vadd.f32 %v2913, %v2972
    %v2974 = vpop.f32.mrf.mxu0
    %v2975 = vadd.f32 %v2913, %v2974
    %2976 = vdwg.mxu0
    %2977 = vmax.xlane.f32.xlu0 %v2973
    %v2978 = vpop.xlane.xlu0 %2977
    %2979 = vmax.xlane.f32.xlu0 %v2975
    %v2980 = vpop.xlane.xlu0 %2979
    %v2981 = vsub.f32 %v2973, %v2978
    %v2982 = vsub.f32 %v2975, %v2980
    %v2983 = vmul.f32 %v2981, 1.442695
    %v2984 = vpow.pop %v2983
    %v2985 = vmul.f32 %v2982, 1.442695
    %v2986 = vpow.pop %v2985
    %2987 = vadd.xlane.f32.xlu0 %v2984
    %v2988 = vpop.xlane.xlu0 %2987
    %2989 = vadd.xlane.f32.xlu0 %v2986
    %v2990 = vpop.xlane.xlu0 %2989
    %v2991 = vlog2.pop %v2988
    %v2992 = vmul.f32 %v2991, 0.6931472
    %v2993 = vlog2.pop %v2990
    %v2994 = vmul.f32 %v2993, 0.6931472
    %v2995 = vsub.f32 %v2981, %v2992
    %v2996 = vsub.f32 %v2982, %v2994
    %2997 = vst [vmem:[#allocation2] sm:$0xff] %v2995
    %2998 = vst [vmem:[#allocation2 + $0x8] sm:$0xff] %v2996
    // Predicated region
    $region38: #{net_forward.1} parent=1 // pred_check
      _
    $region39: #{net_forward.1} parent=1 // pred_check_branch
      %3000 = sbr.rel (0) target = $region41
    $region40: #{net_forward.1} parent=1 // pred_region
      %3002 = vsyncadd [#allocation3], 0
      %s3003 = sshll.u32 [#allocation2], 4
      %s3004 = int_to_ptr.vmem [resolvable:$true] %s3003
      %s3005 = sshll.u32 %s9, 4
      %s3006 = int_to_ptr.hbm [resolvable:$true] %s3005
      %3011 = dma.vmem_to_hbm [thread:$0]  %s3004, 256, %s3006, [#allocation3], 128, 128, 8
    $region41: #{net_forward.1} parent=1 // pred_fallthru
      _
    // Predicated region
    $region42: #{net_forward.1} parent=1 // pred_check
      _
    $region43: #{net_forward.1} parent=1 // pred_check_branch
      %3013 = sbr.rel (0) target = $region45
    $region44: #{net_forward.1} parent=1 // pred_region
      %3015 = dma.done [#allocation3], 256
    $region45: #{net_forward.1} parent=1 // pred_fallthru
      _
    %3016 = vsyncpa [#allocation3], 1

</llo_original>
